<compile_context>
chip_gen: v6e
topology: v6e:2x2x1
jax: 0.10.0
libtpu: 0.0.40
codegen_flags: <defaults>
</compile_context>

<pallas_src>
import math

import numpy as np
import jax
import jax.numpy as jnp
from jax.experimental import pallas as pl

# ---------------------------------------------------------------------------
# Model hyper-parameters (small, consistent with the module's __init__)
# ---------------------------------------------------------------------------
S = 8            # sequence length
B = 2            # batch size
D_MODEL = 32     # d_model
NHEAD = 4        # nhead
HEAD_DIM = D_MODEL // NHEAD
D_FF = 64        # dim_feedforward
LN_EPS = 1e-5
N_ROWS = S * B   # rows of the flattened (S*B, D) activation slab (row = s*B + b)

# ---------------------------------------------------------------------------
# Constant masks (built once at import time; tiny)
# ---------------------------------------------------------------------------
_ROW = np.arange(N_ROWS)
# Additive attention mask: 0 where rows belong to the same batch element,
# -1e9 otherwise (row index i = s*B + b  =>  batch id = i % B).
BATCH_MASK = jnp.asarray(
    np.where((_ROW[:, None] - _ROW[None, :]) % B == 0, 0.0, -1e9),
    dtype=jnp.float32)                                    # (N_ROWS, N_ROWS)

_LANE = np.arange(D_MODEL)
# Per-head 0/1 channel masks over the d_model lanes.
HEAD_MASK = jnp.asarray(
    (_LANE[None, :] // HEAD_DIM) == np.arange(NHEAD)[:, None],
    dtype=jnp.float32)                                    # (NHEAD, D_MODEL)

_TRANS_B_DIMS = (((1,), (1,)), ((), ()))  # contract last dims (q @ k^T, no transpose op)


def _layernorm(x, gamma, beta, eps):
    mu = jnp.mean(x, axis=-1, keepdims=True)
    xc = x - mu
    var = jnp.mean(xc * xc, axis=-1, keepdims=True)
    inv = jax.lax.rsqrt(var + eps)
    return xc * inv * gamma + beta


def encoder_layer_kernel(
    x_ref,          # (N_ROWS, D)  flattened activations, row = s*B + b
    bmask_ref,      # (N_ROWS, N_ROWS) additive cross-batch mask (0 / -1e9)
    hmask_ref,      # (NHEAD, D)   per-head 0/1 channel masks
    wqkv_ref,       # (D, 3D)   (transposed torch in_proj_weight)
    bqkv_ref,       # (1, 3D)
    wo_ref,         # (D, D)    (transposed torch out_proj.weight)
    bo_ref,         # (1, D)
    w1_ref,         # (D, F)
    b1_ref,         # (1, F)
    w2_ref,         # (F, D)
    b2_ref,         # (1, D)
    g1_ref,         # (1, D)  norm1 weight
    be1_ref,        # (1, D)  norm1 bias
    g2_ref,         # (1, D)  norm2 weight
    be2_ref,        # (1, D)  norm2 bias
    o_ref,          # (N_ROWS, D)
):
    x = x_ref[...]                                          # (N, D) float32

    # ---- packed QKV projection on all S*B rows at once ---------------------
    qkv = jnp.dot(x, wqkv_ref[...],
                  preferred_element_type=jnp.float32) + bqkv_ref[...]
    scale = 1.0 / math.sqrt(HEAD_DIM)
    q = qkv[:, :D_MODEL] * scale                            # (N, D)
    k = qkv[:, D_MODEL:2 * D_MODEL]                         # (N, D)
    v = qkv[:, 2 * D_MODEL:]                                # (N, D)

    bmask = bmask_ref[...]                                  # (N, N)
    hmasks = hmask_ref[...]                                 # (H, D)

    # ---- multi-head self-attention via channel masks ------------------------
    # Per head: zero out other heads' channels of Q (and V).  Contracting the
    # full D dimension then only picks up head-h terms; the additive batch
    # mask restricts softmax support to same-batch keys.  Accumulating
    # p @ (v * mask_h) over heads reproduces the concatenated head outputs
    # with no lane slicing of results, no transposes, no concatenate.
    attn = jnp.zeros((N_ROWS, D_MODEL), jnp.float32)
    for h in range(NHEAD):                                  # static, 4 iterations
        hm = hmasks[h:h + 1, :]                             # (1, D)
        qh = q * hm                                         # (N, D)
        s_h = jax.lax.dot_general(qh, k, _TRANS_B_DIMS,
                                  preferred_element_type=jnp.float32)  # (N, N)
        s_h = s_h + bmask
        s_h = s_h - jnp.max(s_h, axis=-1, keepdims=True)
        p = jnp.exp(s_h)
        p = p * pl.reciprocal(jnp.sum(p, axis=-1, keepdims=True), approx=True)
        attn = attn + jnp.dot(p, v * hm,
                              preferred_element_type=jnp.float32)      # (N, D)

    attn_out = jnp.dot(attn, wo_ref[...],
                       preferred_element_type=jnp.float32) + bo_ref[...]

    # ---- residual + norm1 (post-norm) ---------------------------------------
    y = _layernorm(x + attn_out, g1_ref[...], be1_ref[...], LN_EPS)

    # ---- feed-forward: linear1 -> relu -> linear2 ---------------------------
    h1 = jnp.dot(y, w1_ref[...],
                 preferred_element_type=jnp.float32) + b1_ref[...]
    h1 = jnp.maximum(h1, 0.0)                               # relu activation
    ffn = jnp.dot(h1, w2_ref[...],
                  preferred_element_type=jnp.float32) + b2_ref[...]

    # ---- residual + norm2 ----------------------------------------------------
    out = _layernorm(y + ffn, g2_ref[...], be2_ref[...], LN_EPS)
    o_ref[...] = out.astype(o_ref.dtype)


def transformer_encoder_layer(src, params):
    """src: (S, B, D) float32 (batch_first=False)  ->  (S, B, D) float32."""
    s, b, d = src.shape
    x2d = src.reshape(s * b, d)                             # contiguous collapse, no transpose

    out2d = pl.pallas_call(
        encoder_layer_kernel,
        out_shape=jax.ShapeDtypeStruct((s * b, d), jnp.float32),
        # No grid: single step, whole arrays resident in VMEM (total < 64 KB).
    )(
        x2d, BATCH_MASK, HEAD_MASK,
        params["wqkv"], params["bqkv"],
        params["wo"], params["bo"],
        params["w1"], params["b1"],
        params["w2"], params["b2"],
        params["g1"], params["be1"],
        params["g2"], params["be2"],
    )
    return out2d.reshape(s, b, d)


def init_params(key):
    """Deterministic parameter init matching the torch module's shapes.

    Torch stores Linear / MHA weights as (out, in); we keep the transposed
    (in, out) layout so the kernel does x @ W directly.
    """
    ks = jax.random.split(key, 8)
    scale = 0.02
    p = {
        "wqkv": scale * jax.random.normal(ks[0], (D_MODEL, 3 * D_MODEL), jnp.float32),
        "bqkv": scale * jax.random.normal(ks[1], (1, 3 * D_MODEL), jnp.float32),
        "wo":   scale * jax.random.normal(ks[2], (D_MODEL, D_MODEL), jnp.float32),
        "bo":   scale * jax.random.normal(ks[3], (1, D_MODEL), jnp.float32),
        "w1":   scale * jax.random.normal(ks[4], (D_MODEL, D_FF), jnp.float32),
        "b1":   scale * jax.random.normal(ks[5], (1, D_FF), jnp.float32),
        "w2":   scale * jax.random.normal(ks[6], (D_FF, D_MODEL), jnp.float32),
        "b2":   scale * jax.random.normal(ks[7], (1, D_MODEL), jnp.float32),
        "g1":   jnp.ones((1, D_MODEL), jnp.float32),
        "be1":  jnp.zeros((1, D_MODEL), jnp.float32),
        "g2":   jnp.ones((1, D_MODEL), jnp.float32),
        "be2":  jnp.zeros((1, D_MODEL), jnp.float32),
    }
    return p


if __name__ == "__main__":
    key = jax.random.PRNGKey(0)
    k_x, k_p = jax.random.split(key)
    src = jax.random.normal(k_x, (S, B, D_MODEL), jnp.float32)   # (seq, batch, d_model)
    params = init_params(k_p)

    fwd = jax.jit(transformer_encoder_layer)
    out = fwd(src, params)
    jax.block_until_ready(out)
    assert out.shape == (S, B, D_MODEL)
    assert bool(jnp.all(jnp.isfinite(out)))
    print("KERNEL_OK")
</pallas_src>

<mosaic_0001>
module attributes {stable_mosaic.version = 11 : i64} {
  func.func @encoder_layer_kernel(%arg0: memref<16x32xf32, #tpu.memory_space<vmem>>, %arg1: memref<16x16xf32, #tpu.memory_space<vmem>>, %arg2: memref<4x32xf32, #tpu.memory_space<vmem>>, %arg3: memref<32x96xf32, #tpu.memory_space<vmem>>, %arg4: memref<1x96xf32, #tpu.memory_space<vmem>>, %arg5: memref<32x32xf32, #tpu.memory_space<vmem>>, %arg6: memref<1x32xf32, #tpu.memory_space<vmem>>, %arg7: memref<32x64xf32, #tpu.memory_space<vmem>>, %arg8: memref<1x64xf32, #tpu.memory_space<vmem>>, %arg9: memref<64x32xf32, #tpu.memory_space<vmem>>, %arg10: memref<1x32xf32, #tpu.memory_space<vmem>>, %arg11: memref<1x32xf32, #tpu.memory_space<vmem>>, %arg12: memref<1x32xf32, #tpu.memory_space<vmem>>, %arg13: memref<1x32xf32, #tpu.memory_space<vmem>>, %arg14: memref<1x32xf32, #tpu.memory_space<vmem>>, %arg15: memref<16x32xf32, #tpu.memory_space<vmem>>) attributes {dimension_semantics = [], scalar_prefetch = 0 : i64, scratch_operands = 0 : i64, tpu.core_type = #tpu.core_type<tc>} {
    %c0 = arith.constant 0 : index
    %c0_0 = arith.constant 0 : index
    %0 = vector.load %arg0[%c0, %c0_0] : memref<16x32xf32, #tpu.memory_space<vmem>>, vector<16x32xf32>
    %c0_1 = arith.constant 0 : index
    %c0_2 = arith.constant 0 : index
    %1 = vector.load %arg3[%c0_1, %c0_2] : memref<32x96xf32, #tpu.memory_space<vmem>>, vector<32x96xf32>
    %cst = arith.constant dense<0.000000e+00> : vector<16x96xf32>
    %2 = tpu.matmul %0, %1, %cst {dimension_numbers = #tpu.dot_dimension_numbers<[1], [0], [0], [1], [0, 0, 1, 1], [], []>} : vector<16x32xf32>, vector<32x96xf32>, vector<16x96xf32> -> vector<16x96xf32>
    %c0_3 = arith.constant 0 : index
    %c0_4 = arith.constant 0 : index
    %3 = vector.load %arg4[%c0_3, %c0_4] : memref<1x96xf32, #tpu.memory_space<vmem>>, vector<1x96xf32>
    %4 = vector.broadcast %3 : vector<1x96xf32> to vector<16x96xf32>
    %5 = arith.addf %2, %4 : vector<16x96xf32>
    %6 = vector.extract_strided_slice %5 {offsets = [0, 0], sizes = [16, 32], strides = [1, 1]} : vector<16x96xf32> to vector<16x32xf32>
    %cst_5 = arith.constant 0.353553385 : f32
    %7 = vector.broadcast %cst_5 : f32 to vector<16x32xf32>
    %8 = arith.mulf %6, %7 : vector<16x32xf32>
    %9 = vector.extract_strided_slice %5 {offsets = [0, 32], sizes = [16, 32], strides = [1, 1]} : vector<16x96xf32> to vector<16x32xf32>
    %10 = vector.extract_strided_slice %5 {offsets = [0, 64], sizes = [16, 32], strides = [1, 1]} : vector<16x96xf32> to vector<16x32xf32>
    %c0_6 = arith.constant 0 : index
    %c0_7 = arith.constant 0 : index
    %11 = vector.load %arg1[%c0_6, %c0_7] : memref<16x16xf32, #tpu.memory_space<vmem>>, vector<16x16xf32>
    %c0_8 = arith.constant 0 : index
    %c0_9 = arith.constant 0 : index
    %12 = vector.load %arg2[%c0_8, %c0_9] : memref<4x32xf32, #tpu.memory_space<vmem>>, vector<4x32xf32>
    %cst_10 = arith.constant 0.000000e+00 : f32
    %13 = vector.broadcast %cst_10 : f32 to vector<16x32xf32>
    %14 = vector.extract_strided_slice %12 {offsets = [0, 0], sizes = [1, 32], strides = [1, 1]} : vector<4x32xf32> to vector<1x32xf32>
    %15 = vector.broadcast %14 : vector<1x32xf32> to vector<16x32xf32>
    %16 = arith.mulf %8, %15 : vector<16x32xf32>
    %cst_11 = arith.constant dense<0.000000e+00> : vector<16x16xf32>
    %17 = tpu.matmul %16, %9, %cst_11 {dimension_numbers = #tpu.dot_dimension_numbers<[1], [1], [0], [0], [0, 0, 1, 0], [], []>} : vector<16x32xf32>, vector<16x32xf32>, vector<16x16xf32> -> vector<16x16xf32>
    %18 = arith.addf %17, %11 : vector<16x16xf32>
    %cst_12 = arith.constant dense<0xFF800000> : vector<16xf32>
    %19 = vector.multi_reduction <maximumf>, %18, %cst_12 [1] : vector<16x16xf32> to vector<16xf32>
    %20 = vector.shape_cast %19 : vector<16xf32> to vector<16x1xf32>
    %21 = vector.broadcast %20 : vector<16x1xf32> to vector<16x16xf32>
    %22 = arith.subf %18, %21 : vector<16x16xf32>
    %23 = math.exp %22 : vector<16x16xf32>
    %cst_13 = arith.constant dense<0.000000e+00> : vector<16xf32>
    %24 = vector.multi_reduction <add>, %23, %cst_13 [1] : vector<16x16xf32> to vector<16xf32>
    %25 = vector.shape_cast %24 : vector<16xf32> to vector<16x1xf32>
    %26 = tpu.reciprocal %25 {approx = true} : vector<16x1xf32> -> vector<16x1xf32>
    %27 = vector.broadcast %26 : vector<16x1xf32> to vector<16x16xf32>
    %28 = arith.mulf %23, %27 : vector<16x16xf32>
    %29 = vector.broadcast %14 : vector<1x32xf32> to vector<16x32xf32>
    %30 = arith.mulf %10, %29 : vector<16x32xf32>
    %cst_14 = arith.constant dense<0.000000e+00> : vector<16x32xf32>
    %31 = tpu.matmul %28, %30, %cst_14 {dimension_numbers = #tpu.dot_dimension_numbers<[1], [0], [0], [1], [0, 0, 1, 1], [], []>} : vector<16x16xf32>, vector<16x32xf32>, vector<16x32xf32> -> vector<16x32xf32>
    %32 = arith.addf %13, %31 : vector<16x32xf32>
    %33 = vector.extract_strided_slice %12 {offsets = [1, 0], sizes = [1, 32], strides = [1, 1]} : vector<4x32xf32> to vector<1x32xf32>
    %34 = vector.broadcast %33 : vector<1x32xf32> to vector<16x32xf32>
    %35 = arith.mulf %8, %34 : vector<16x32xf32>
    %cst_15 = arith.constant dense<0.000000e+00> : vector<16x16xf32>
    %36 = tpu.matmul %35, %9, %cst_15 {dimension_numbers = #tpu.dot_dimension_numbers<[1], [1], [0], [0], [0, 0, 1, 0], [], []>} : vector<16x32xf32>, vector<16x32xf32>, vector<16x16xf32> -> vector<16x16xf32>
    %37 = arith.addf %36, %11 : vector<16x16xf32>
    %cst_16 = arith.constant dense<0xFF800000> : vector<16xf32>
    %38 = vector.multi_reduction <maximumf>, %37, %cst_16 [1] : vector<16x16xf32> to vector<16xf32>
    %39 = vector.shape_cast %38 : vector<16xf32> to vector<16x1xf32>
    %40 = vector.broadcast %39 : vector<16x1xf32> to vector<16x16xf32>
    %41 = arith.subf %37, %40 : vector<16x16xf32>
    %42 = math.exp %41 : vector<16x16xf32>
    %cst_17 = arith.constant dense<0.000000e+00> : vector<16xf32>
    %43 = vector.multi_reduction <add>, %42, %cst_17 [1] : vector<16x16xf32> to vector<16xf32>
    %44 = vector.shape_cast %43 : vector<16xf32> to vector<16x1xf32>
    %45 = tpu.reciprocal %44 {approx = true} : vector<16x1xf32> -> vector<16x1xf32>
    %46 = vector.broadcast %45 : vector<16x1xf32> to vector<16x16xf32>
    %47 = arith.mulf %42, %46 : vector<16x16xf32>
    %48 = vector.broadcast %33 : vector<1x32xf32> to vector<16x32xf32>
    %49 = arith.mulf %10, %48 : vector<16x32xf32>
    %cst_18 = arith.constant dense<0.000000e+00> : vector<16x32xf32>
    %50 = tpu.matmul %47, %49, %cst_18 {dimension_numbers = #tpu.dot_dimension_numbers<[1], [0], [0], [1], [0, 0, 1, 1], [], []>} : vector<16x16xf32>, vector<16x32xf32>, vector<16x32xf32> -> vector<16x32xf32>
    %51 = arith.addf %32, %50 : vector<16x32xf32>
    %52 = vector.extract_strided_slice %12 {offsets = [2, 0], sizes = [1, 32], strides = [1, 1]} : vector<4x32xf32> to vector<1x32xf32>
    %53 = vector.broadcast %52 : vector<1x32xf32> to vector<16x32xf32>
    %54 = arith.mulf %8, %53 : vector<16x32xf32>
    %cst_19 = arith.constant dense<0.000000e+00> : vector<16x16xf32>
    %55 = tpu.matmul %54, %9, %cst_19 {dimension_numbers = #tpu.dot_dimension_numbers<[1], [1], [0], [0], [0, 0, 1, 0], [], []>} : vector<16x32xf32>, vector<16x32xf32>, vector<16x16xf32> -> vector<16x16xf32>
    %56 = arith.addf %55, %11 : vector<16x16xf32>
    %cst_20 = arith.constant dense<0xFF800000> : vector<16xf32>
    %57 = vector.multi_reduction <maximumf>, %56, %cst_20 [1] : vector<16x16xf32> to vector<16xf32>
    %58 = vector.shape_cast %57 : vector<16xf32> to vector<16x1xf32>
    %59 = vector.broadcast %58 : vector<16x1xf32> to vector<16x16xf32>
    %60 = arith.subf %56, %59 : vector<16x16xf32>
    %61 = math.exp %60 : vector<16x16xf32>
    %cst_21 = arith.constant dense<0.000000e+00> : vector<16xf32>
    %62 = vector.multi_reduction <add>, %61, %cst_21 [1] : vector<16x16xf32> to vector<16xf32>
    %63 = vector.shape_cast %62 : vector<16xf32> to vector<16x1xf32>
    %64 = tpu.reciprocal %63 {approx = true} : vector<16x1xf32> -> vector<16x1xf32>
    %65 = vector.broadcast %64 : vector<16x1xf32> to vector<16x16xf32>
    %66 = arith.mulf %61, %65 : vector<16x16xf32>
    %67 = vector.broadcast %52 : vector<1x32xf32> to vector<16x32xf32>
    %68 = arith.mulf %10, %67 : vector<16x32xf32>
    %cst_22 = arith.constant dense<0.000000e+00> : vector<16x32xf32>
    %69 = tpu.matmul %66, %68, %cst_22 {dimension_numbers = #tpu.dot_dimension_numbers<[1], [0], [0], [1], [0, 0, 1, 1], [], []>} : vector<16x16xf32>, vector<16x32xf32>, vector<16x32xf32> -> vector<16x32xf32>
    %70 = arith.addf %51, %69 : vector<16x32xf32>
    %71 = vector.extract_strided_slice %12 {offsets = [3, 0], sizes = [1, 32], strides = [1, 1]} : vector<4x32xf32> to vector<1x32xf32>
    %72 = vector.broadcast %71 : vector<1x32xf32> to vector<16x32xf32>
    %73 = arith.mulf %8, %72 : vector<16x32xf32>
    %cst_23 = arith.constant dense<0.000000e+00> : vector<16x16xf32>
    %74 = tpu.matmul %73, %9, %cst_23 {dimension_numbers = #tpu.dot_dimension_numbers<[1], [1], [0], [0], [0, 0, 1, 0], [], []>} : vector<16x32xf32>, vector<16x32xf32>, vector<16x16xf32> -> vector<16x16xf32>
    %75 = arith.addf %74, %11 : vector<16x16xf32>
    %cst_24 = arith.constant dense<0xFF800000> : vector<16xf32>
    %76 = vector.multi_reduction <maximumf>, %75, %cst_24 [1] : vector<16x16xf32> to vector<16xf32>
    %77 = vector.shape_cast %76 : vector<16xf32> to vector<16x1xf32>
    %78 = vector.broadcast %77 : vector<16x1xf32> to vector<16x16xf32>
    %79 = arith.subf %75, %78 : vector<16x16xf32>
    %80 = math.exp %79 : vector<16x16xf32>
    %cst_25 = arith.constant dense<0.000000e+00> : vector<16xf32>
    %81 = vector.multi_reduction <add>, %80, %cst_25 [1] : vector<16x16xf32> to vector<16xf32>
    %82 = vector.shape_cast %81 : vector<16xf32> to vector<16x1xf32>
    %83 = tpu.reciprocal %82 {approx = true} : vector<16x1xf32> -> vector<16x1xf32>
    %84 = vector.broadcast %83 : vector<16x1xf32> to vector<16x16xf32>
    %85 = arith.mulf %80, %84 : vector<16x16xf32>
    %86 = vector.broadcast %71 : vector<1x32xf32> to vector<16x32xf32>
    %87 = arith.mulf %10, %86 : vector<16x32xf32>
    %cst_26 = arith.constant dense<0.000000e+00> : vector<16x32xf32>
    %88 = tpu.matmul %85, %87, %cst_26 {dimension_numbers = #tpu.dot_dimension_numbers<[1], [0], [0], [1], [0, 0, 1, 1], [], []>} : vector<16x16xf32>, vector<16x32xf32>, vector<16x32xf32> -> vector<16x32xf32>
    %89 = arith.addf %70, %88 : vector<16x32xf32>
    %c0_27 = arith.constant 0 : index
    %c0_28 = arith.constant 0 : index
    %90 = vector.load %arg5[%c0_27, %c0_28] : memref<32x32xf32, #tpu.memory_space<vmem>>, vector<32x32xf32>
    %cst_29 = arith.constant dense<0.000000e+00> : vector<16x32xf32>
    %91 = tpu.matmul %89, %90, %cst_29 {dimension_numbers = #tpu.dot_dimension_numbers<[1], [0], [0], [1], [0, 0, 1, 1], [], []>} : vector<16x32xf32>, vector<32x32xf32>, vector<16x32xf32> -> vector<16x32xf32>
    %c0_30 = arith.constant 0 : index
    %c0_31 = arith.constant 0 : index
    %92 = vector.load %arg6[%c0_30, %c0_31] : memref<1x32xf32, #tpu.memory_space<vmem>>, vector<1x32xf32>
    %93 = vector.broadcast %92 : vector<1x32xf32> to vector<16x32xf32>
    %94 = arith.addf %91, %93 : vector<16x32xf32>
    %95 = arith.addf %0, %94 : vector<16x32xf32>
    %c0_32 = arith.constant 0 : index
    %c0_33 = arith.constant 0 : index
    %96 = vector.load %arg11[%c0_32, %c0_33] : memref<1x32xf32, #tpu.memory_space<vmem>>, vector<1x32xf32>
    %c0_34 = arith.constant 0 : index
    %c0_35 = arith.constant 0 : index
    %97 = vector.load %arg12[%c0_34, %c0_35] : memref<1x32xf32, #tpu.memory_space<vmem>>, vector<1x32xf32>
    %cst_36 = arith.constant dense<0.000000e+00> : vector<16xf32>
    %98 = vector.multi_reduction <add>, %95, %cst_36 [1] : vector<16x32xf32> to vector<16xf32>
    %99 = vector.shape_cast %98 : vector<16xf32> to vector<16x1xf32>
    %cst_37 = arith.constant 3.200000e+01 : f32
    %100 = vector.broadcast %cst_37 : f32 to vector<16x1xf32>
    %101 = arith.divf %99, %100 : vector<16x1xf32>
    %102 = vector.broadcast %101 : vector<16x1xf32> to vector<16x32xf32>
    %103 = arith.subf %95, %102 : vector<16x32xf32>
    %104 = arith.mulf %103, %103 : vector<16x32xf32>
    %cst_38 = arith.constant dense<0.000000e+00> : vector<16xf32>
    %105 = vector.multi_reduction <add>, %104, %cst_38 [1] : vector<16x32xf32> to vector<16xf32>
    %106 = vector.shape_cast %105 : vector<16xf32> to vector<16x1xf32>
    %cst_39 = arith.constant 3.200000e+01 : f32
    %107 = vector.broadcast %cst_39 : f32 to vector<16x1xf32>
    %108 = arith.divf %106, %107 : vector<16x1xf32>
    %cst_40 = arith.constant 9.99999974E-6 : f32
    %109 = vector.broadcast %cst_40 : f32 to vector<16x1xf32>
    %110 = arith.addf %108, %109 : vector<16x1xf32>
    %111 = math.rsqrt %110 : vector<16x1xf32>
    %112 = vector.broadcast %111 : vector<16x1xf32> to vector<16x32xf32>
    %113 = arith.mulf %103, %112 : vector<16x32xf32>
    %114 = vector.broadcast %96 : vector<1x32xf32> to vector<16x32xf32>
    %115 = arith.mulf %113, %114 : vector<16x32xf32>
    %116 = vector.broadcast %97 : vector<1x32xf32> to vector<16x32xf32>
    %117 = arith.addf %115, %116 : vector<16x32xf32>
    %c0_41 = arith.constant 0 : index
    %c0_42 = arith.constant 0 : index
    %118 = vector.load %arg7[%c0_41, %c0_42] : memref<32x64xf32, #tpu.memory_space<vmem>>, vector<32x64xf32>
    %cst_43 = arith.constant dense<0.000000e+00> : vector<16x64xf32>
    %119 = tpu.matmul %117, %118, %cst_43 {dimension_numbers = #tpu.dot_dimension_numbers<[1], [0], [0], [1], [0, 0, 1, 1], [], []>} : vector<16x32xf32>, vector<32x64xf32>, vector<16x64xf32> -> vector<16x64xf32>
    %c0_44 = arith.constant 0 : index
    %c0_45 = arith.constant 0 : index
    %120 = vector.load %arg8[%c0_44, %c0_45] : memref<1x64xf32, #tpu.memory_space<vmem>>, vector<1x64xf32>
    %121 = vector.broadcast %120 : vector<1x64xf32> to vector<16x64xf32>
    %122 = arith.addf %119, %121 : vector<16x64xf32>
    %cst_46 = arith.constant 0.000000e+00 : f32
    %123 = vector.broadcast %cst_46 : f32 to vector<16x64xf32>
    %124 = arith.maximumf %122, %123 : vector<16x64xf32>
    %c0_47 = arith.constant 0 : index
    %c0_48 = arith.constant 0 : index
    %125 = vector.load %arg9[%c0_47, %c0_48] : memref<64x32xf32, #tpu.memory_space<vmem>>, vector<64x32xf32>
    %cst_49 = arith.constant dense<0.000000e+00> : vector<16x32xf32>
    %126 = tpu.matmul %124, %125, %cst_49 {dimension_numbers = #tpu.dot_dimension_numbers<[1], [0], [0], [1], [0, 0, 1, 1], [], []>} : vector<16x64xf32>, vector<64x32xf32>, vector<16x32xf32> -> vector<16x32xf32>
    %c0_50 = arith.constant 0 : index
    %c0_51 = arith.constant 0 : index
    %127 = vector.load %arg10[%c0_50, %c0_51] : memref<1x32xf32, #tpu.memory_space<vmem>>, vector<1x32xf32>
    %128 = vector.broadcast %127 : vector<1x32xf32> to vector<16x32xf32>
    %129 = arith.addf %126, %128 : vector<16x32xf32>
    %130 = arith.addf %117, %129 : vector<16x32xf32>
    %c0_52 = arith.constant 0 : index
    %c0_53 = arith.constant 0 : index
    %131 = vector.load %arg13[%c0_52, %c0_53] : memref<1x32xf32, #tpu.memory_space<vmem>>, vector<1x32xf32>
    %c0_54 = arith.constant 0 : index
    %c0_55 = arith.constant 0 : index
    %132 = vector.load %arg14[%c0_54, %c0_55] : memref<1x32xf32, #tpu.memory_space<vmem>>, vector<1x32xf32>
    %cst_56 = arith.constant dense<0.000000e+00> : vector<16xf32>
    %133 = vector.multi_reduction <add>, %130, %cst_56 [1] : vector<16x32xf32> to vector<16xf32>
    %134 = vector.shape_cast %133 : vector<16xf32> to vector<16x1xf32>
    %cst_57 = arith.constant 3.200000e+01 : f32
    %135 = vector.broadcast %cst_57 : f32 to vector<16x1xf32>
    %136 = arith.divf %134, %135 : vector<16x1xf32>
    %137 = vector.broadcast %136 : vector<16x1xf32> to vector<16x32xf32>
    %138 = arith.subf %130, %137 : vector<16x32xf32>
    %139 = arith.mulf %138, %138 : vector<16x32xf32>
    %cst_58 = arith.constant dense<0.000000e+00> : vector<16xf32>
    %140 = vector.multi_reduction <add>, %139, %cst_58 [1] : vector<16x32xf32> to vector<16xf32>
    %141 = vector.shape_cast %140 : vector<16xf32> to vector<16x1xf32>
    %cst_59 = arith.constant 3.200000e+01 : f32
    %142 = vector.broadcast %cst_59 : f32 to vector<16x1xf32>
    %143 = arith.divf %141, %142 : vector<16x1xf32>
    %cst_60 = arith.constant 9.99999974E-6 : f32
    %144 = vector.broadcast %cst_60 : f32 to vector<16x1xf32>
    %145 = arith.addf %143, %144 : vector<16x1xf32>
    %146 = math.rsqrt %145 : vector<16x1xf32>
    %147 = vector.broadcast %146 : vector<16x1xf32> to vector<16x32xf32>
    %148 = arith.mulf %138, %147 : vector<16x32xf32>
    %149 = vector.broadcast %131 : vector<1x32xf32> to vector<16x32xf32>
    %150 = arith.mulf %148, %149 : vector<16x32xf32>
    %151 = vector.broadcast %132 : vector<1x32xf32> to vector<16x32xf32>
    %152 = arith.addf %150, %151 : vector<16x32xf32>
    %c0_61 = arith.constant 0 : index
    %c0_62 = arith.constant 0 : index
    %153 = vector.load %arg15[%c0_61, %c0_62] : memref<16x32xf32, #tpu.memory_space<vmem>>, vector<16x32xf32>
    tpu.vector_store %arg15[%c0_61, %c0_62], %152 {strides = array<i32>} : memref<16x32xf32, #tpu.memory_space<vmem>>, vector<16x32xf32>,
    return
  }
}

</mosaic_0001>

<llo_original>
// kernel: transformer_encoder_layer.1
$region0: #{transformer_encoder_layer.1}
  #allocation0 [shape = 'u32[]', space=smem, size = 0x4, offset = 0x4, fixed_abs, tag = 'smem constant byte address 0x4 - core index']
  #allocation1 [shape = 'u32[144,128]{1,0:T(1,128)}', space=vmem, size = 0x12000, scoped, tag = 'internal scratch']
  %s0 = inlined_call_operand.hbm [shape: f32[16,32], index: 0, kind: input, shape index: {}]
  %s1 = inlined_call_operand.vmem [shape: f32[16,16], index: 1, kind: input, shape index: {}]
  %s2 = inlined_call_operand.vmem [shape: f32[4,32], index: 2, kind: input, shape index: {}]
  %s3 = inlined_call_operand.vmem [shape: f32[32,96], index: 3, kind: input, shape index: {}]
  %s4 = inlined_call_operand.hbm [shape: f32[1,96], index: 4, kind: input, shape index: {}]
  %s5 = inlined_call_operand.vmem [shape: f32[32,32], index: 5, kind: input, shape index: {}]
  %s6 = inlined_call_operand.hbm [shape: f32[1,32], index: 6, kind: input, shape index: {}]
  %s7 = inlined_call_operand.vmem [shape: f32[32,64], index: 7, kind: input, shape index: {}]
  %s8 = inlined_call_operand.hbm [shape: f32[1,64], index: 8, kind: input, shape index: {}]
  %s9 = inlined_call_operand.vmem [shape: f32[64,32], index: 9, kind: input, shape index: {}]
  %s10 = inlined_call_operand.hbm [shape: f32[1,32], index: 10, kind: input, shape index: {}]
  %s11 = inlined_call_operand.hbm [shape: f32[1,32], index: 11, kind: input, shape index: {}]
  %s12 = inlined_call_operand.hbm [shape: f32[1,32], index: 12, kind: input, shape index: {}]
  %s13 = inlined_call_operand.hbm [shape: f32[1,32], index: 13, kind: input, shape index: {}]
  %s14 = inlined_call_operand.hbm [shape: f32[1,32], index: 14, kind: input, shape index: {}]
  %s15 = inlined_call_operand.hbm [shape: f32[16,32], index: 15, kind: output, shape index: {}]
  %s16 = sld [smem:[#allocation0]]
  $region106: #{transformer_encoder_layer.1} parent=0
    _
  %s18 = ssub.s32 1, %s16
  %s19 = scalar_select 0, %s18, %s16
  $region1: #{transformer_encoder_layer.1} parent=0
    #allocation2 [shape = 'u8[8192]{0}', space=vmem, size = 0x2000, scoped, tag = 'input window, operand 0, single buffered']
    #allocation3 [shape = 's32[1]{0}', space=sflag, size = 0x4, scoped, tag = 'scoped memory for transformer_encoder_layer.1']
    #allocation4 [shape = 's32[1]{0}', space=sflag, size = 0x4, scoped, tag = 'scoped memory for transformer_encoder_layer.1']
    #allocation5 [shape = 'u8[512]{0}', space=vmem, size = 0x400, scoped, tag = 'input window, operand 4, single buffered']
    #allocation6 [shape = 's32[1]{0}', space=sflag, size = 0x4, scoped, tag = 'scoped memory for transformer_encoder_layer.1']
    #allocation7 [shape = 'u8[512]{0}', space=vmem, size = 0x400, scoped, tag = 'input window, operand 6, single buffered']
    #allocation8 [shape = 'u8[512]{0}', space=vmem, size = 0x400, scoped, tag = 'input window, operand 8, single buffered']
    #allocation9 [shape = 's32[1]{0}', space=sflag, size = 0x4, scoped, tag = 'scoped memory for transformer_encoder_layer.1']
    #allocation10 [shape = 'u8[512]{0}', space=vmem, size = 0x400, scoped, tag = 'input window, operand 10, single buffered']
    #allocation11 [shape = 'u8[512]{0}', space=vmem, size = 0x400, scoped, tag = 'input window, operand 11, single buffered']
    #allocation12 [shape = 's32[1]{0}', space=sflag, size = 0x4, scoped, tag = 'scoped memory for transformer_encoder_layer.1']
    #allocation13 [shape = 'u8[512]{0}', space=vmem, size = 0x400, scoped, tag = 'input window, operand 12, single buffered']
    #allocation14 [shape = 'u8[512]{0}', space=vmem, size = 0x400, scoped, tag = 'input window, operand 13, single buffered']
    #allocation15 [shape = 's32[1]{0}', space=sflag, size = 0x4, scoped, tag = 'scoped memory for transformer_encoder_layer.1']
    #allocation16 [shape = 'u8[512]{0}', space=vmem, size = 0x400, scoped, tag = 'input window, operand 14, single buffered']
    #allocation17 [shape = 'u8[8192]{0}', space=vmem, size = 0x2000, scoped, tag = 'output window, operand 0, single buffered']
    %20 = vsyncpa [#allocation3], 0
    %21 = vsyncpa [#allocation6], 0
    %22 = vsyncpa [#allocation9], 0
    %23 = vsyncpa [#allocation12], 0
    %24 = vsyncpa [#allocation15], 0
    %25 = vsyncpa [#allocation4], 0
    // Predicated region
    $region2: #{transformer_encoder_layer.1} parent=1 // pred_check
      _
    $region3: #{transformer_encoder_layer.1} parent=1 // pred_check_branch
      %27 = sbr.rel (0) target = $region5
    $region4: #{transformer_encoder_layer.1} parent=1 // pred_region
      %s29 = ssub.s32 256, 256
      %30 = vsyncadd [#allocation3], %s29
      %s31 = sshll.u32 [#allocation2], 4
      %s32 = int_to_ptr.vmem [resolvable:$true] %s31
      %37 = dma.hbm_to_vmem [thread:$0]  %s0, 256, %s32, [#allocation3], 128, 128, 8
    $region5: #{transformer_encoder_layer.1} parent=1 // pred_fallthru
      _
    // Predicated region
    $region6: #{transformer_encoder_layer.1} parent=1 // pred_check
      _
    $region7: #{transformer_encoder_layer.1} parent=1 // pred_check_branch
      %39 = sbr.rel (0) target = $region9
    $region8: #{transformer_encoder_layer.1} parent=1 // pred_region
      _
    $region9: #{transformer_encoder_layer.1} parent=1 // pred_fallthru
      _
    // Predicated region
    $region10: #{transformer_encoder_layer.1} parent=1 // pred_check
      _
    $region11: #{transformer_encoder_layer.1} parent=1 // pred_check_branch
      %41 = sbr.rel (0) target = $region13
    $region12: #{transformer_encoder_layer.1} parent=1 // pred_region
      _
    $region13: #{transformer_encoder_layer.1} parent=1 // pred_fallthru
      _
    // Predicated region
    $region14: #{transformer_encoder_layer.1} parent=1 // pred_check
      _
    $region15: #{transformer_encoder_layer.1} parent=1 // pred_check_branch
      %43 = sbr.rel (0) target = $region17
    $region16: #{transformer_encoder_layer.1} parent=1 // pred_region
      _
    $region17: #{transformer_encoder_layer.1} parent=1 // pred_fallthru
      _
    // Predicated region
    $region18: #{transformer_encoder_layer.1} parent=1 // pred_check
      _
    $region19: #{transformer_encoder_layer.1} parent=1 // pred_check_branch
      %45 = sbr.rel (0) target = $region21
    $region20: #{transformer_encoder_layer.1} parent=1 // pred_region
      %s47 = ssub.s32 16, 16
      %48 = vsyncadd [#allocation6], %s47
      %s50 = sshll.u32 [#allocation5], 4
      %s51 = int_to_ptr.vmem [resolvable:$true] %s50
      %53 = dma.hbm_to_vmem [thread:$0]  %s4, 16, %s51, [#allocation6]
    $region21: #{transformer_encoder_layer.1} parent=1 // pred_fallthru
      _
    // Predicated region
    $region22: #{transformer_encoder_layer.1} parent=1 // pred_check
      _
    $region23: #{transformer_encoder_layer.1} parent=1 // pred_check_branch
      %55 = sbr.rel (0) target = $region25
    $region24: #{transformer_encoder_layer.1} parent=1 // pred_region
      _
    $region25: #{transformer_encoder_layer.1} parent=1 // pred_fallthru
      _
    // Predicated region
    $region26: #{transformer_encoder_layer.1} parent=1 // pred_check
      _
    $region27: #{transformer_encoder_layer.1} parent=1 // pred_check_branch
      %57 = sbr.rel (0) target = $region29
    $region28: #{transformer_encoder_layer.1} parent=1 // pred_region
      %s59 = ssub.s32 16, 16
      %60 = vsyncadd [#allocation6], %s59
      %s62 = sshll.u32 [#allocation7], 4
      %s63 = int_to_ptr.vmem [resolvable:$true] %s62
      %65 = dma.hbm_to_vmem [thread:$0]  %s6, 16, %s63, [#allocation6]
    $region29: #{transformer_encoder_layer.1} parent=1 // pred_fallthru
      _
    // Predicated region
    $region30: #{transformer_encoder_layer.1} parent=1 // pred_check
      _
    $region31: #{transformer_encoder_layer.1} parent=1 // pred_check_branch
      %67 = sbr.rel (0) target = $region33
    $region32: #{transformer_encoder_layer.1} parent=1 // pred_region
      _
    $region33: #{transformer_encoder_layer.1} parent=1 // pred_fallthru
      _
    // Predicated region
    $region34: #{transformer_encoder_layer.1} parent=1 // pred_check
      _
    $region35: #{transformer_encoder_layer.1} parent=1 // pred_check_branch
      %69 = sbr.rel (0) target = $region37
    $region36: #{transformer_encoder_layer.1} parent=1 // pred_region
      %s71 = ssub.s32 16, 16
      %72 = vsyncadd [#allocation9], %s71
      %s74 = sshll.u32 [#allocation8], 4
      %s75 = int_to_ptr.vmem [resolvable:$true] %s74
      %77 = dma.hbm_to_vmem [thread:$0]  %s8, 16, %s75, [#allocation9]
    $region37: #{transformer_encoder_layer.1} parent=1 // pred_fallthru
      _
    // Predicated region
    $region38: #{transformer_encoder_layer.1} parent=1 // pred_check
      _
    $region39: #{transformer_encoder_layer.1} parent=1 // pred_check_branch
      %79 = sbr.rel (0) target = $region41
    $region40: #{transformer_encoder_layer.1} parent=1 // pred_region
      _
    $region41: #{transformer_encoder_layer.1} parent=1 // pred_fallthru
      _
    // Predicated region
    $region42: #{transformer_encoder_layer.1} parent=1 // pred_check
      _
    $region43: #{transformer_encoder_layer.1} parent=1 // pred_check_branch
      %81 = sbr.rel (0) target = $region45
    $region44: #{transformer_encoder_layer.1} parent=1 // pred_region
      %s83 = ssub.s32 16, 16
      %84 = vsyncadd [#allocation9], %s83
      %s86 = sshll.u32 [#allocation10], 4
      %s87 = int_to_ptr.vmem [resolvable:$true] %s86
      %89 = dma.hbm_to_vmem [thread:$0]  %s10, 16, %s87, [#allocation9]
    $region45: #{transformer_encoder_layer.1} parent=1 // pred_fallthru
      _
    // Predicated region
    $region46: #{transformer_encoder_layer.1} parent=1 // pred_check
      _
    $region47: #{transformer_encoder_layer.1} parent=1 // pred_check_branch
      %91 = sbr.rel (0) target = $region49
    $region48: #{transformer_encoder_layer.1} parent=1 // pred_region
      %s93 = ssub.s32 16, 16
      %94 = vsyncadd [#allocation12], %s93
      %s96 = sshll.u32 [#allocation11], 4
      %s97 = int_to_ptr.vmem [resolvable:$true] %s96
      %99 = dma.hbm_to_vmem [thread:$0]  %s11, 16, %s97, [#allocation12]
    $region49: #{transformer_encoder_layer.1} parent=1 // pred_fallthru
      _
    // Predicated region
    $region50: #{transformer_encoder_layer.1} parent=1 // pred_check
      _
    $region51: #{transformer_encoder_layer.1} parent=1 // pred_check_branch
      %101 = sbr.rel (0) target = $region53
    $region52: #{transformer_encoder_layer.1} parent=1 // pred_region
      %s103 = ssub.s32 16, 16
      %104 = vsyncadd [#allocation12], %s103
      %s106 = sshll.u32 [#allocation13], 4
      %s107 = int_to_ptr.vmem [resolvable:$true] %s106
      %109 = dma.hbm_to_vmem [thread:$0]  %s12, 16, %s107, [#allocation12]
    $region53: #{transformer_encoder_layer.1} parent=1 // pred_fallthru
      _
    // Predicated region
    $region54: #{transformer_encoder_layer.1} parent=1 // pred_check
      _
    $region55: #{transformer_encoder_layer.1} parent=1 // pred_check_branch
      %111 = sbr.rel (0) target = $region57
    $region56: #{transformer_encoder_layer.1} parent=1 // pred_region
      %s113 = ssub.s32 16, 16
      %114 = vsyncadd [#allocation15], %s113
      %s116 = sshll.u32 [#allocation14], 4
      %s117 = int_to_ptr.vmem [resolvable:$true] %s116
      %119 = dma.hbm_to_vmem [thread:$0]  %s13, 16, %s117, [#allocation15]
    $region57: #{transformer_encoder_layer.1} parent=1 // pred_fallthru
      _
    // Predicated region
    $region58: #{transformer_encoder_layer.1} parent=1 // pred_check
      _
    $region59: #{transformer_encoder_layer.1} parent=1 // pred_check_branch
      %121 = sbr.rel (0) target = $region61
    $region60: #{transformer_encoder_layer.1} parent=1 // pred_region
      %s123 = ssub.s32 16, 16
      %124 = vsyncadd [#allocation15], %s123
      %s126 = sshll.u32 [#allocation16], 4
      %s127 = int_to_ptr.vmem [resolvable:$true] %s126
      %129 = dma.hbm_to_vmem [thread:$0]  %s14, 16, %s127, [#allocation15]
    $region61: #{transformer_encoder_layer.1} parent=1 // pred_fallthru
      _
    // Predicated region
    $region62: #{transformer_encoder_layer.1} parent=1 // pred_check
      _
    $region63: #{transformer_encoder_layer.1} parent=1 // pred_check_branch
      %131 = sbr.rel (0) target = $region65
    $region64: #{transformer_encoder_layer.1} parent=1 // pred_region
      %132 = dma.done [#allocation3], 256
    $region65: #{transformer_encoder_layer.1} parent=1 // pred_fallthru
      _
    // Predicated region
    $region66: #{transformer_encoder_layer.1} parent=1 // pred_check
      _
    $region67: #{transformer_encoder_layer.1} parent=1 // pred_check_branch
      %134 = sbr.rel (0) target = $region69
    $region68: #{transformer_encoder_layer.1} parent=1 // pred_region
      %135 = dma.done [#allocation6], 16
    $region69: #{transformer_encoder_layer.1} parent=1 // pred_fallthru
      _
    // Predicated region
    $region70: #{transformer_encoder_layer.1} parent=1 // pred_check
      _
    $region71: #{transformer_encoder_layer.1} parent=1 // pred_check_branch
      %137 = sbr.rel (0) target = $region73
    $region72: #{transformer_encoder_layer.1} parent=1 // pred_region
      %138 = dma.done [#allocation6], 16
    $region73: #{transformer_encoder_layer.1} parent=1 // pred_fallthru
      _
    // Predicated region
    $region74: #{transformer_encoder_layer.1} parent=1 // pred_check
      _
    $region75: #{transformer_encoder_layer.1} parent=1 // pred_check_branch
      %140 = sbr.rel (0) target = $region77
    $region76: #{transformer_encoder_layer.1} parent=1 // pred_region
      %141 = dma.done [#allocation9], 16
    $region77: #{transformer_encoder_layer.1} parent=1 // pred_fallthru
      _
    // Predicated region
    $region78: #{transformer_encoder_layer.1} parent=1 // pred_check
      _
    $region79: #{transformer_encoder_layer.1} parent=1 // pred_check_branch
      %143 = sbr.rel (0) target = $region81
    $region80: #{transformer_encoder_layer.1} parent=1 // pred_region
      %144 = dma.done [#allocation9], 16
    $region81: #{transformer_encoder_layer.1} parent=1 // pred_fallthru
      _
    // Predicated region
    $region82: #{transformer_encoder_layer.1} parent=1 // pred_check
      _
    $region83: #{transformer_encoder_layer.1} parent=1 // pred_check_branch
      %146 = sbr.rel (0) target = $region85
    $region84: #{transformer_encoder_layer.1} parent=1 // pred_region
      %147 = dma.done [#allocation12], 16
    $region85: #{transformer_encoder_layer.1} parent=1 // pred_fallthru
      _
    // Predicated region
    $region86: #{transformer_encoder_layer.1} parent=1 // pred_check
      _
    $region87: #{transformer_encoder_layer.1} parent=1 // pred_check_branch
      %149 = sbr.rel (0) target = $region89
    $region88: #{transformer_encoder_layer.1} parent=1 // pred_region
      %150 = dma.done [#allocation12], 16
    $region89: #{transformer_encoder_layer.1} parent=1 // pred_fallthru
      _
    // Predicated region
    $region90: #{transformer_encoder_layer.1} parent=1 // pred_check
      _
    $region91: #{transformer_encoder_layer.1} parent=1 // pred_check_branch
      %152 = sbr.rel (0) target = $region93
    $region92: #{transformer_encoder_layer.1} parent=1 // pred_region
      %153 = dma.done [#allocation15], 16
    $region93: #{transformer_encoder_layer.1} parent=1 // pred_fallthru
      _
    // Predicated region
    $region94: #{transformer_encoder_layer.1} parent=1 // pred_check
      _
    $region95: #{transformer_encoder_layer.1} parent=1 // pred_check_branch
      %155 = sbr.rel (0) target = $region97
    $region96: #{transformer_encoder_layer.1} parent=1 // pred_region
      %156 = dma.done [#allocation15], 16
    $region97: #{transformer_encoder_layer.1} parent=1 // pred_fallthru
      _
    %v157 = vld [vmem:[#allocation2] sm:$0xff]
    %v158 = vld [vmem:[#allocation2 + $0x8] sm:$0xff]
    %v159 = vld [vmem:[%s3] sm:$0xff]
    %v160 = vld [vmem:[%s3 + $0x8] sm:$0xff]
    %v161 = vld [vmem:[%s3 + $0x10] sm:$0xff]
    %v162 = vld [vmem:[%s3 + $0x18] sm:$0xff]
    %v163 = vld [vmem:[#allocation5] sm:$0x1]
    %v165 = vlaneseq
    %v166 = vshrl.u32 %v165, 7
    %v167 = vsub.s32 0, %v166
    %v168 = vrot.slane %v163, %v167
    %vm170 = vcmask 261120
    %v172 = vsel %vm170, %v157, 0
    %v175 = vsel %vm170, %v158, 0
    %177 = vmatprep.subr.mxu0 0.0
    %178 = vmatpush1.msra.mxu0 0.0
    %179 = vmatprep.subr.mxu0 0.0
    %180 = vmatpush1.msra.mxu0 0.0
    %181 = vmatprep.subr.mxu0 0.0
    %182 = vmatpush1.msra.mxu0 0.0
    %183 = vmatprep.subr.mxu0 0.0
    %184 = vmatpush1.msra.mxu0 0.0
    %185 = vmatprep.subr.mxu0 0.0
    %186 = vmatpush1.msra.mxu0 0.0
    %187 = vmatprep.subr.mxu0 0.0
    %188 = vmatpush1.msra.mxu0 0.0
    %189 = vmatprep.subr.mxu0 0.0
    %190 = vmatpush1.msra.mxu0 0.0
    %191 = vmatprep.subr.mxu0 0.0
    %192 = vmatpush1.msra.mxu0 0.0
    %193 = vmatprep.subr.mxu0 0.0
    %194 = vmatpush1.msra.mxu0 0.0
    %195 = vmatprep.subr.mxu0 0.0
    %196 = vmatpush1.msra.mxu0 0.0
    %197 = vmatprep.subr.mxu0 0.0
    %198 = vmatpush1.msra.mxu0 0.0
    %199 = vmatprep.subr.mxu0 0.0
    %200 = vmatpush1.msra.mxu0 0.0
    %201 = vmatprep.subr.mxu0 0.0
    %202 = vmatpush1.msra.mxu0 %v162
    %203 = vmatprep.subr.mxu0 0.0
    %204 = vmatpush1.msra.mxu0 %v161
    %205 = vmatprep.subr.mxu0 0.0
    %206 = vmatpush1.msra.mxu0 %v160
    %207 = vmatprep.subr.mxu0 0.0
    %208 = vmatpush1.msra.mxu0 %v159
    %209 = vmatprep.subr.mxu0 0.0
    %210 = vmatpush2.msra.mxu0 0.0
    %211 = vmatprep.subr.mxu0 0.0
    %212 = vmatpush2.msra.mxu0 0.0
    %213 = vmatprep.subr.mxu0 0.0
    %214 = vmatpush2.msra.mxu0 0.0
    %215 = vmatprep.subr.mxu0 0.0
    %216 = vmatpush2.msra.mxu0 0.0
    %217 = vmatprep.subr.mxu0 0.0
    %218 = vmatpush2.msra.mxu0 0.0
    %219 = vmatprep.subr.mxu0 0.0
    %220 = vmatpush2.msra.mxu0 0.0
    %221 = vmatprep.subr.mxu0 0.0
    %222 = vmatpush2.msra.mxu0 0.0
    %223 = vmatprep.subr.mxu0 0.0
    %224 = vmatpush2.msra.mxu0 0.0
    %225 = vmatprep.subr.mxu0 0.0
    %226 = vmatpush2.msra.mxu0 0.0
    %227 = vmatprep.subr.mxu0 0.0
    %228 = vmatpush2.msra.mxu0 0.0
    %229 = vmatprep.subr.mxu0 0.0
    %230 = vmatpush2.msra.mxu0 0.0
    %231 = vmatprep.subr.mxu0 0.0
    %232 = vmatpush2.msra.mxu0 0.0
    %233 = vmatprep.subr.mxu0 0.0
    %234 = vmatpush2.msra.mxu0 0.0
    %235 = vmatprep.subr.mxu0 0.0
    %236 = vmatpush2.msra.mxu0 0.0
    %237 = vmatprep.subr.mxu0 0.0
    %238 = vmatpush2.msra.mxu0 0.0
    %239 = vmatprep.subr.mxu0 0.0
    %240 = vmatpush2.msra.mxu0 0.0
    %241 = vmatprep.mubr.f32.mxu0 0.0
    %242 = vmatmul.mubr.f32.gmra.mxu0 %v172
    %v243 = vpop.f32.mrf.mxu0
    %v244 = vadd.f32 %v168, %v243
    %v245 = vpop.f32.mrf.mxu0
    %246 = vmatprep.mubr.f32.mxu0 0.0
    %247 = vmatmul.mubr.f32.gmra.mxu0 %v175
    %v248 = vpop.f32.mrf.mxu0
    %v249 = vadd.f32 %v168, %v248
    %v250 = vpop.f32.mrf.mxu0
    %251 = vdwg.mxu0
    %v252 = vmul.f32 %v244, 0.35355338
    %v253 = vmul.f32 %v249, 0.35355338
    %v254 = vld [vmem:[%s1] sm:$0xff]
    %v255 = vld [vmem:[%s1 + $0x8] sm:$0xff]
    %v256 = vld [vmem:[%s2] sm:$0xf]
    %v257 = vlaneseq
    %v258 = vshrl.u32 %v257, 7
    %v259 = vsub.s32 0, %v258
    %v260 = vrot.slane %v256, %v259
    %v261 = vmul.f32 %v252, %v260
    %v262 = vmul.f32 %v253, %v260
    %265 = vrot.lane.b32.xlu0 %v244, 96
    %v266 = vpop.permute.xlu0 %265
    %267 = vrot.lane.b32.xlu0 %v249, 96
    %v268 = vpop.permute.xlu0 %267
    %v270 = vsel %vm170, %v261, 0
    %v273 = vsel %vm170, %v262, 0
    %v275 = vsel %vm170, %v266, 0
    %v277 = vsel %vm170, %v268, 0
    %279 = vmatprep.subr.mxu0 0.0
    %280 = vmatpush1.xpose.msra.mxu0 0.0
    %281 = vmatprep.subr.mxu0 0.0
    %282 = vmatpush1.xpose.msra.mxu0 0.0
    %283 = vmatprep.subr.mxu0 0.0
    %284 = vmatpush1.xpose.msra.mxu0 0.0
    %285 = vmatprep.subr.mxu0 0.0
    %286 = vmatpush1.xpose.msra.mxu0 0.0
    %287 = vmatprep.subr.mxu0 0.0
    %288 = vmatpush1.xpose.msra.mxu0 0.0
    %289 = vmatprep.subr.mxu0 0.0
    %290 = vmatpush1.xpose.msra.mxu0 0.0
    %291 = vmatprep.subr.mxu0 0.0
    %292 = vmatpush1.xpose.msra.mxu0 0.0
    %293 = vmatprep.subr.mxu0 0.0
    %294 = vmatpush1.xpose.msra.mxu0 0.0
    %295 = vmatprep.subr.mxu0 0.0
    %296 = vmatpush1.xpose.msra.mxu0 0.0
    %297 = vmatprep.subr.mxu0 0.0
    %298 = vmatpush1.xpose.msra.mxu0 0.0
    %299 = vmatprep.subr.mxu0 0.0
    %300 = vmatpush1.xpose.msra.mxu0 0.0
    %301 = vmatprep.subr.mxu0 0.0
    %302 = vmatpush1.xpose.msra.mxu0 0.0
    %303 = vmatprep.subr.mxu0 0.0
    %304 = vmatpush1.xpose.msra.mxu0 0.0
    %305 = vmatprep.subr.mxu0 0.0
    %306 = vmatpush1.xpose.msra.mxu0 0.0
    %307 = vmatprep.subr.mxu0 0.0
    %308 = vmatpush1.xpose.msra.mxu0 %v277
    %309 = vmatprep.subr.mxu0 0.0
    %310 = vmatpush1.xpose.msra.mxu0 %v275
    %311 = vmatprep.subr.mxu0 0.0
    %312 = vmatpush2.xpose.msra.mxu0 0.0
    %313 = vmatprep.subr.mxu0 0.0
    %314 = vmatpush2.xpose.msra.mxu0 0.0
    %315 = vmatprep.subr.mxu0 0.0
    %316 = vmatpush2.xpose.msra.mxu0 0.0
    %317 = vmatprep.subr.mxu0 0.0
    %318 = vmatpush2.xpose.msra.mxu0 0.0
    %319 = vmatprep.subr.mxu0 0.0
    %320 = vmatpush2.xpose.msra.mxu0 0.0
    %321 = vmatprep.subr.mxu0 0.0
    %322 = vmatpush2.xpose.msra.mxu0 0.0
    %323 = vmatprep.subr.mxu0 0.0
    %324 = vmatpush2.xpose.msra.mxu0 0.0
    %325 = vmatprep.subr.mxu0 0.0
    %326 = vmatpush2.xpose.msra.mxu0 0.0
    %327 = vmatprep.subr.mxu0 0.0
    %328 = vmatpush2.xpose.msra.mxu0 0.0
    %329 = vmatprep.subr.mxu0 0.0
    %330 = vmatpush2.xpose.msra.mxu0 0.0
    %331 = vmatprep.subr.mxu0 0.0
    %332 = vmatpush2.xpose.msra.mxu0 0.0
    %333 = vmatprep.subr.mxu0 0.0
    %334 = vmatpush2.xpose.msra.mxu0 0.0
    %335 = vmatprep.subr.mxu0 0.0
    %336 = vmatpush2.xpose.msra.mxu0 0.0
    %337 = vmatprep.subr.mxu0 0.0
    %338 = vmatpush2.xpose.msra.mxu0 0.0
    %339 = vmatprep.subr.mxu0 0.0
    %340 = vmatpush2.xpose.msra.mxu0 0.0
    %341 = vmatprep.subr.mxu0 0.0
    %342 = vmatpush2.xpose.msra.mxu0 0.0
    %343 = vmatprep.mubr.f32.mxu0 0.0
    %344 = vmatmul.mubr.f32.gmra.mxu0 %v270
    %v345 = vpop.f32.mrf.mxu0
    %v346 = vadd.f32 %v254, %v345
    %v347 = vpop.f32.mrf.mxu0
    %348 = vmatprep.mubr.f32.mxu0 0.0
    %349 = vmatmul.mubr.f32.gmra.mxu0 %v273
    %v350 = vpop.f32.mrf.mxu0
    %v351 = vadd.f32 %v255, %v350
    %v352 = vpop.f32.mrf.mxu0
    %353 = vdwg.mxu0
    %vm354 = vcmask 130048
    %v355 = vsel %vm354, %v346, -inf
    %356 = vmax.xlane.f32.xlu0 %v355
    %v357 = vpop.xlane.xlu0 %356
    %v358 = vsel %vm354, %v351, -inf
    %359 = vmax.xlane.f32.xlu0 %v358
    %v360 = vpop.xlane.xlu0 %359
    %v361 = vsub.f32 %v346, %v357
    %v362 = vsub.f32 %v351, %v360
    %v363 = vmul.f32 %v361, 1.442695
    %v364 = vpow.pop %v363
    %v365 = vmul.f32 %v362, 1.442695
    %v366 = vpow.pop %v365
    %v367 = vsel %vm354, %v364, 0.0
    %368 = vadd.xlane.f32.xlu0 %v367
    %v369 = vpop.xlane.xlu0 %368
    %v370 = vsel %vm354, %v366, 0.0
    %371 = vadd.xlane.f32.xlu0 %v370
    %v372 = vpop.xlane.xlu0 %371
    %v373 = vrcp.pop %v369
    %v374 = vrcp.pop %v372
    %v375 = vmul.f32 %v364, %v373
    %v376 = vmul.f32 %v366, %v374
    %378 = vrot.lane.b32.xlu0 %v260, 64
    %v379 = vpop.permute.xlu0 %378
    %v381 = vmul.f32 %v244, %v379
    %v382 = vmul.f32 %v249, %v379
    %v383 = vlaneseq
    %v384 = vshrl.u32 %v383, 7
    %v385 = vsub.s32 1, %v384
    %v386 = vrot.slane %v256, %v385
    %v387 = vmul.f32 %v252, %v386
    %v388 = vmul.f32 %v253, %v386
    %v390 = vsel %vm170, %v387, 0
    %v393 = vsel %vm170, %v388, 0
    %395 = vmatprep.subr.mxu0 0.0
    %396 = vmatpush1.xpose.msra.mxu0 0.0
    %397 = vmatprep.subr.mxu0 0.0
    %398 = vmatpush1.xpose.msra.mxu0 0.0
    %399 = vmatprep.subr.mxu0 0.0
    %400 = vmatpush1.xpose.msra.mxu0 0.0
    %401 = vmatprep.subr.mxu0 0.0
    %402 = vmatpush1.xpose.msra.mxu0 0.0
    %403 = vmatprep.subr.mxu0 0.0
    %404 = vmatpush1.xpose.msra.mxu0 0.0
    %405 = vmatprep.subr.mxu0 0.0
    %406 = vmatpush1.xpose.msra.mxu0 0.0
    %407 = vmatprep.subr.mxu0 0.0
    %408 = vmatpush1.xpose.msra.mxu0 0.0
    %409 = vmatprep.subr.mxu0 0.0
    %410 = vmatpush1.xpose.msra.mxu0 0.0
    %411 = vmatprep.subr.mxu0 0.0
    %412 = vmatpush1.xpose.msra.mxu0 0.0
    %413 = vmatprep.subr.mxu0 0.0
    %414 = vmatpush1.xpose.msra.mxu0 0.0
    %415 = vmatprep.subr.mxu0 0.0
    %416 = vmatpush1.xpose.msra.mxu0 0.0
    %417 = vmatprep.subr.mxu0 0.0
    %418 = vmatpush1.xpose.msra.mxu0 0.0
    %419 = vmatprep.subr.mxu0 0.0
    %420 = vmatpush1.xpose.msra.mxu0 0.0
    %421 = vmatprep.subr.mxu0 0.0
    %422 = vmatpush1.xpose.msra.mxu0 0.0
    %423 = vmatprep.subr.mxu0 0.0
    %424 = vmatpush1.xpose.msra.mxu0 %v277
    %425 = vmatprep.subr.mxu0 0.0
    %426 = vmatpush1.xpose.msra.mxu0 %v275
    %427 = vmatprep.subr.mxu0 0.0
    %428 = vmatpush2.xpose.msra.mxu0 0.0
    %429 = vmatprep.subr.mxu0 0.0
    %430 = vmatpush2.xpose.msra.mxu0 0.0
    %431 = vmatprep.subr.mxu0 0.0
    %432 = vmatpush2.xpose.msra.mxu0 0.0
    %433 = vmatprep.subr.mxu0 0.0
    %434 = vmatpush2.xpose.msra.mxu0 0.0
    %435 = vmatprep.subr.mxu0 0.0
    %436 = vmatpush2.xpose.msra.mxu0 0.0
    %437 = vmatprep.subr.mxu0 0.0
    %438 = vmatpush2.xpose.msra.mxu0 0.0
    %439 = vmatprep.subr.mxu0 0.0
    %440 = vmatpush2.xpose.msra.mxu0 0.0
    %441 = vmatprep.subr.mxu0 0.0
    %442 = vmatpush2.xpose.msra.mxu0 0.0
    %443 = vmatprep.subr.mxu0 0.0
    %444 = vmatpush2.xpose.msra.mxu0 0.0
    %445 = vmatprep.subr.mxu0 0.0
    %446 = vmatpush2.xpose.msra.mxu0 0.0
    %447 = vmatprep.subr.mxu0 0.0
    %448 = vmatpush2.xpose.msra.mxu0 0.0
    %449 = vmatprep.subr.mxu0 0.0
    %450 = vmatpush2.xpose.msra.mxu0 0.0
    %451 = vmatprep.subr.mxu0 0.0
    %452 = vmatpush2.xpose.msra.mxu0 0.0
    %453 = vmatprep.subr.mxu0 0.0
    %454 = vmatpush2.xpose.msra.mxu0 0.0
    %455 = vmatprep.subr.mxu0 0.0
    %456 = vmatpush2.xpose.msra.mxu0 0.0
    %457 = vmatprep.subr.mxu0 0.0
    %458 = vmatpush2.xpose.msra.mxu0 0.0
    %459 = vmatprep.mubr.f32.mxu0 0.0
    %460 = vmatmul.mubr.f32.gmra.mxu0 %v390
    %v461 = vpop.f32.mrf.mxu0
    %v462 = vadd.f32 %v254, %v461
    %v463 = vpop.f32.mrf.mxu0
    %464 = vmatprep.mubr.f32.mxu0 0.0
    %465 = vmatmul.mubr.f32.gmra.mxu0 %v393
    %v466 = vpop.f32.mrf.mxu0
    %v467 = vadd.f32 %v255, %v466
    %v468 = vpop.f32.mrf.mxu0
    %469 = vdwg.mxu0
    %v470 = vsel %vm354, %v462, -inf
    %471 = vmax.xlane.f32.xlu0 %v470
    %v472 = vpop.xlane.xlu0 %471
    %v473 = vsel %vm354, %v467, -inf
    %474 = vmax.xlane.f32.xlu0 %v473
    %v475 = vpop.xlane.xlu0 %474
    %v476 = vsub.f32 %v462, %v472
    %v477 = vsub.f32 %v467, %v475
    %v478 = vmul.f32 %v476, 1.442695
    %v479 = vpow.pop %v478
    %v480 = vmul.f32 %v477, 1.442695
    %v481 = vpow.pop %v480
    %v482 = vsel %vm354, %v479, 0.0
    %483 = vadd.xlane.f32.xlu0 %v482
    %v484 = vpop.xlane.xlu0 %483
    %v485 = vsel %vm354, %v481, 0.0
    %486 = vadd.xlane.f32.xlu0 %v485
    %v487 = vpop.xlane.xlu0 %486
    %v488 = vrcp.pop %v484
    %v489 = vrcp.pop %v487
    %v490 = vmul.f32 %v479, %v488
    %v491 = vmul.f32 %v481, %v489
    %493 = vrot.lane.b32.xlu0 %v386, 64
    %v494 = vpop.permute.xlu0 %493
    %v496 = vmul.f32 %v244, %v494
    %v497 = vmul.f32 %v249, %v494
    %500 = vrot.lane.b32.xlu0 %v496, 64
    %v501 = vpop.permute.xlu0 %500
    %502 = vrot.lane.b32.xlu0 %v497, 64
    %v503 = vpop.permute.xlu0 %502
    %v507 = vsel %vm354, %v490, 0
    %v510 = vsel %vm354, %v491, 0
    %512 = vmatprep.subr.mxu0 0.0
    %513 = vmatpush1.msra.mxu0 0.0
    %514 = vmatprep.subr.mxu0 0.0
    %515 = vmatpush1.msra.mxu0 0.0
    %516 = vmatprep.subr.mxu0 0.0
    %517 = vmatpush1.msra.mxu0 0.0
    %518 = vmatprep.subr.mxu0 0.0
    %519 = vmatpush1.msra.mxu0 0.0
    %520 = vmatprep.subr.mxu0 0.0
    %521 = vmatpush1.msra.mxu0 0.0
    %522 = vmatprep.subr.mxu0 0.0
    %523 = vmatpush1.msra.mxu0 0.0
    %524 = vmatprep.subr.mxu0 0.0
    %525 = vmatpush1.msra.mxu0 0.0
    %526 = vmatprep.subr.mxu0 0.0
    %527 = vmatpush1.msra.mxu0 0.0
    %528 = vmatprep.subr.mxu0 0.0
    %529 = vmatpush1.msra.mxu0 0.0
    %530 = vmatprep.subr.mxu0 0.0
    %531 = vmatpush1.msra.mxu0 0.0
    %532 = vmatprep.subr.mxu0 0.0
    %533 = vmatpush1.msra.mxu0 0.0
    %534 = vmatprep.subr.mxu0 0.0
    %535 = vmatpush1.msra.mxu0 0.0
    %536 = vmatprep.subr.mxu0 0.0
    %537 = vmatpush1.msra.mxu0 0.0
    %538 = vmatprep.subr.mxu0 0.0
    %539 = vmatpush1.msra.mxu0 0.0
    %540 = vmatprep.subr.mxu0 0.0
    %541 = vmatpush1.msra.mxu0 %v503
    %542 = vmatprep.subr.mxu0 0.0
    %543 = vmatpush1.msra.mxu0 %v501
    %544 = vmatprep.subr.mxu0 0.0
    %545 = vmatpush2.msra.mxu0 0.0
    %546 = vmatprep.subr.mxu0 0.0
    %547 = vmatpush2.msra.mxu0 0.0
    %548 = vmatprep.subr.mxu0 0.0
    %549 = vmatpush2.msra.mxu0 0.0
    %550 = vmatprep.subr.mxu0 0.0
    %551 = vmatpush2.msra.mxu0 0.0
    %552 = vmatprep.subr.mxu0 0.0
    %553 = vmatpush2.msra.mxu0 0.0
    %554 = vmatprep.subr.mxu0 0.0
    %555 = vmatpush2.msra.mxu0 0.0
    %556 = vmatprep.subr.mxu0 0.0
    %557 = vmatpush2.msra.mxu0 0.0
    %558 = vmatprep.subr.mxu0 0.0
    %559 = vmatpush2.msra.mxu0 0.0
    %560 = vmatprep.subr.mxu0 0.0
    %561 = vmatpush2.msra.mxu0 0.0
    %562 = vmatprep.subr.mxu0 0.0
    %563 = vmatpush2.msra.mxu0 0.0
    %564 = vmatprep.subr.mxu0 0.0
    %565 = vmatpush2.msra.mxu0 0.0
    %566 = vmatprep.subr.mxu0 0.0
    %567 = vmatpush2.msra.mxu0 0.0
    %568 = vmatprep.subr.mxu0 0.0
    %569 = vmatpush2.msra.mxu0 0.0
    %570 = vmatprep.subr.mxu0 0.0
    %571 = vmatpush2.msra.mxu0 0.0
    %572 = vmatprep.subr.mxu0 0.0
    %573 = vmatpush2.msra.mxu0 0.0
    %574 = vmatprep.subr.mxu0 0.0
    %575 = vmatpush2.msra.mxu0 0.0
    %576 = vmatprep.mubr.f32.mxu0 0.0
    %577 = vmatmul.mubr.f32.gmra.mxu0 %v507
    %v578 = vpop.f32.mrf.mxu0
    %v579 = vadd.f32 0.0, %v578
    %v580 = vpop.f32.mrf.mxu0
    %581 = vmatprep.mubr.f32.mxu0 0.0
    %582 = vmatmul.mubr.f32.gmra.mxu0 %v510
    %v583 = vpop.f32.mrf.mxu0
    %v584 = vadd.f32 0.0, %v583
    %v585 = vpop.f32.mrf.mxu0
    %586 = vdwg.mxu0
    %589 = vrot.lane.b32.xlu0 %v381, 64
    %v590 = vpop.permute.xlu0 %589
    %591 = vrot.lane.b32.xlu0 %v382, 64
    %v592 = vpop.permute.xlu0 %591
    %v596 = vsel %vm354, %v375, 0
    %v599 = vsel %vm354, %v376, 0
    %601 = vmatprep.subr.mxu0 0.0
    %602 = vmatpush1.msra.mxu0 0.0
    %603 = vmatprep.subr.mxu0 0.0
    %604 = vmatpush1.msra.mxu0 0.0
    %605 = vmatprep.subr.mxu0 0.0
    %606 = vmatpush1.msra.mxu0 0.0
    %607 = vmatprep.subr.mxu0 0.0
    %608 = vmatpush1.msra.mxu0 0.0
    %609 = vmatprep.subr.mxu0 0.0
    %610 = vmatpush1.msra.mxu0 0.0
    %611 = vmatprep.subr.mxu0 0.0
    %612 = vmatpush1.msra.mxu0 0.0
    %613 = vmatprep.subr.mxu0 0.0
    %614 = vmatpush1.msra.mxu0 0.0
    %615 = vmatprep.subr.mxu0 0.0
    %616 = vmatpush1.msra.mxu0 0.0
    %617 = vmatprep.subr.mxu0 0.0
    %618 = vmatpush1.msra.mxu0 0.0
    %619 = vmatprep.subr.mxu0 0.0
    %620 = vmatpush1.msra.mxu0 0.0
    %621 = vmatprep.subr.mxu0 0.0
    %622 = vmatpush1.msra.mxu0 0.0
    %623 = vmatprep.subr.mxu0 0.0
    %624 = vmatpush1.msra.mxu0 0.0
    %625 = vmatprep.subr.mxu0 0.0
    %626 = vmatpush1.msra.mxu0 0.0
    %627 = vmatprep.subr.mxu0 0.0
    %628 = vmatpush1.msra.mxu0 0.0
    %629 = vmatprep.subr.mxu0 0.0
    %630 = vmatpush1.msra.mxu0 %v592
    %631 = vmatprep.subr.mxu0 0.0
    %632 = vmatpush1.msra.mxu0 %v590
    %633 = vmatprep.subr.mxu0 0.0
    %634 = vmatpush2.msra.mxu0 0.0
    %635 = vmatprep.subr.mxu0 0.0
    %636 = vmatpush2.msra.mxu0 0.0
    %637 = vmatprep.subr.mxu0 0.0
    %638 = vmatpush2.msra.mxu0 0.0
    %639 = vmatprep.subr.mxu0 0.0
    %640 = vmatpush2.msra.mxu0 0.0
    %641 = vmatprep.subr.mxu0 0.0
    %642 = vmatpush2.msra.mxu0 0.0
    %643 = vmatprep.subr.mxu0 0.0
    %644 = vmatpush2.msra.mxu0 0.0
    %645 = vmatprep.subr.mxu0 0.0
    %646 = vmatpush2.msra.mxu0 0.0
    %647 = vmatprep.subr.mxu0 0.0
    %648 = vmatpush2.msra.mxu0 0.0
    %649 = vmatprep.subr.mxu0 0.0
    %650 = vmatpush2.msra.mxu0 0.0
    %651 = vmatprep.subr.mxu0 0.0
    %652 = vmatpush2.msra.mxu0 0.0
    %653 = vmatprep.subr.mxu0 0.0
    %654 = vmatpush2.msra.mxu0 0.0
    %655 = vmatprep.subr.mxu0 0.0
    %656 = vmatpush2.msra.mxu0 0.0
    %657 = vmatprep.subr.mxu0 0.0
    %658 = vmatpush2.msra.mxu0 0.0
    %659 = vmatprep.subr.mxu0 0.0
    %660 = vmatpush2.msra.mxu0 0.0
    %661 = vmatprep.subr.mxu0 0.0
    %662 = vmatpush2.msra.mxu0 0.0
    %663 = vmatprep.subr.mxu0 0.0
    %664 = vmatpush2.msra.mxu0 0.0
    %665 = vmatprep.mubr.f32.mxu0 0.0
    %666 = vmatmul.mubr.f32.gmra.mxu0 %v596
    %v667 = vpop.f32.mrf.mxu0
    %v668 = vadd.f32 %v579, %v667
    %v669 = vpop.f32.mrf.mxu0
    %670 = vmatprep.mubr.f32.mxu0 0.0
    %671 = vmatmul.mubr.f32.gmra.mxu0 %v599
    %v672 = vpop.f32.mrf.mxu0
    %v673 = vadd.f32 %v584, %v672
    %v674 = vpop.f32.mrf.mxu0
    %675 = vdwg.mxu0
    %v676 = vlaneseq
    %v677 = vshrl.u32 %v676, 7
    %v678 = vsub.s32 2, %v677
    %v679 = vrot.slane %v256, %v678
    %v680 = vmul.f32 %v252, %v679
    %v681 = vmul.f32 %v253, %v679
    %v683 = vsel %vm170, %v680, 0
    %v686 = vsel %vm170, %v681, 0
    %688 = vmatprep.subr.mxu0 0.0
    %689 = vmatpush1.xpose.msra.mxu0 0.0
    %690 = vmatprep.subr.mxu0 0.0
    %691 = vmatpush1.xpose.msra.mxu0 0.0
    %692 = vmatprep.subr.mxu0 0.0
    %693 = vmatpush1.xpose.msra.mxu0 0.0
    %694 = vmatprep.subr.mxu0 0.0
    %695 = vmatpush1.xpose.msra.mxu0 0.0
    %696 = vmatprep.subr.mxu0 0.0
    %697 = vmatpush1.xpose.msra.mxu0 0.0
    %698 = vmatprep.subr.mxu0 0.0
    %699 = vmatpush1.xpose.msra.mxu0 0.0
    %700 = vmatprep.subr.mxu0 0.0
    %701 = vmatpush1.xpose.msra.mxu0 0.0
    %702 = vmatprep.subr.mxu0 0.0
    %703 = vmatpush1.xpose.msra.mxu0 0.0
    %704 = vmatprep.subr.mxu0 0.0
    %705 = vmatpush1.xpose.msra.mxu0 0.0
    %706 = vmatprep.subr.mxu0 0.0
    %707 = vmatpush1.xpose.msra.mxu0 0.0
    %708 = vmatprep.subr.mxu0 0.0
    %709 = vmatpush1.xpose.msra.mxu0 0.0
    %710 = vmatprep.subr.mxu0 0.0
    %711 = vmatpush1.xpose.msra.mxu0 0.0
    %712 = vmatprep.subr.mxu0 0.0
    %713 = vmatpush1.xpose.msra.mxu0 0.0
    %714 = vmatprep.subr.mxu0 0.0
    %715 = vmatpush1.xpose.msra.mxu0 0.0
    %716 = vmatprep.subr.mxu0 0.0
    %717 = vmatpush1.xpose.msra.mxu0 %v277
    %718 = vmatprep.subr.mxu0 0.0
    %719 = vmatpush1.xpose.msra.mxu0 %v275
    %720 = vmatprep.subr.mxu0 0.0
    %721 = vmatpush2.xpose.msra.mxu0 0.0
    %722 = vmatprep.subr.mxu0 0.0
    %723 = vmatpush2.xpose.msra.mxu0 0.0
    %724 = vmatprep.subr.mxu0 0.0
    %725 = vmatpush2.xpose.msra.mxu0 0.0
    %726 = vmatprep.subr.mxu0 0.0
    %727 = vmatpush2.xpose.msra.mxu0 0.0
    %728 = vmatprep.subr.mxu0 0.0
    %729 = vmatpush2.xpose.msra.mxu0 0.0
    %730 = vmatprep.subr.mxu0 0.0
    %731 = vmatpush2.xpose.msra.mxu0 0.0
    %732 = vmatprep.subr.mxu0 0.0
    %733 = vmatpush2.xpose.msra.mxu0 0.0
    %734 = vmatprep.subr.mxu0 0.0
    %735 = vmatpush2.xpose.msra.mxu0 0.0
    %736 = vmatprep.subr.mxu0 0.0
    %737 = vmatpush2.xpose.msra.mxu0 0.0
    %738 = vmatprep.subr.mxu0 0.0
    %739 = vmatpush2.xpose.msra.mxu0 0.0
    %740 = vmatprep.subr.mxu0 0.0
    %741 = vmatpush2.xpose.msra.mxu0 0.0
    %742 = vmatprep.subr.mxu0 0.0
    %743 = vmatpush2.xpose.msra.mxu0 0.0
    %744 = vmatprep.subr.mxu0 0.0
    %745 = vmatpush2.xpose.msra.mxu0 0.0
    %746 = vmatprep.subr.mxu0 0.0
    %747 = vmatpush2.xpose.msra.mxu0 0.0
    %748 = vmatprep.subr.mxu0 0.0
    %749 = vmatpush2.xpose.msra.mxu0 0.0
    %750 = vmatprep.subr.mxu0 0.0
    %751 = vmatpush2.xpose.msra.mxu0 0.0
    %752 = vmatprep.mubr.f32.mxu0 0.0
    %753 = vmatmul.mubr.f32.gmra.mxu0 %v683
    %v754 = vpop.f32.mrf.mxu0
    %v755 = vadd.f32 %v254, %v754
    %v756 = vpop.f32.mrf.mxu0
    %757 = vmatprep.mubr.f32.mxu0 0.0
    %758 = vmatmul.mubr.f32.gmra.mxu0 %v686
    %v759 = vpop.f32.mrf.mxu0
    %v760 = vadd.f32 %v255, %v759
    %v761 = vpop.f32.mrf.mxu0
    %762 = vdwg.mxu0
    %v763 = vsel %vm354, %v755, -inf
    %764 = vmax.xlane.f32.xlu0 %v763
    %v765 = vpop.xlane.xlu0 %764
    %v766 = vsel %vm354, %v760, -inf
    %767 = vmax.xlane.f32.xlu0 %v766
    %v768 = vpop.xlane.xlu0 %767
    %v769 = vsub.f32 %v755, %v765
    %v770 = vsub.f32 %v760, %v768
    %v771 = vmul.f32 %v769, 1.442695
    %v772 = vpow.pop %v771
    %v773 = vmul.f32 %v770, 1.442695
    %v774 = vpow.pop %v773
    %v775 = vsel %vm354, %v772, 0.0
    %776 = vadd.xlane.f32.xlu0 %v775
    %v777 = vpop.xlane.xlu0 %776
    %v778 = vsel %vm354, %v774, 0.0
    %779 = vadd.xlane.f32.xlu0 %v778
    %v780 = vpop.xlane.xlu0 %779
    %v781 = vrcp.pop %v777
    %v782 = vrcp.pop %v780
    %v783 = vmul.f32 %v772, %v781
    %v784 = vmul.f32 %v774, %v782
    %786 = vrot.lane.b32.xlu0 %v679, 64
    %v787 = vpop.permute.xlu0 %786
    %v789 = vmul.f32 %v244, %v787
    %v790 = vmul.f32 %v249, %v787
    %793 = vrot.lane.b32.xlu0 %v789, 64
    %v794 = vpop.permute.xlu0 %793
    %795 = vrot.lane.b32.xlu0 %v790, 64
    %v796 = vpop.permute.xlu0 %795
    %v800 = vsel %vm354, %v783, 0
    %v803 = vsel %vm354, %v784, 0
    %805 = vmatprep.subr.mxu0 0.0
    %806 = vmatpush1.msra.mxu0 0.0
    %807 = vmatprep.subr.mxu0 0.0
    %808 = vmatpush1.msra.mxu0 0.0
    %809 = vmatprep.subr.mxu0 0.0
    %810 = vmatpush1.msra.mxu0 0.0
    %811 = vmatprep.subr.mxu0 0.0
    %812 = vmatpush1.msra.mxu0 0.0
    %813 = vmatprep.subr.mxu0 0.0
    %814 = vmatpush1.msra.mxu0 0.0
    %815 = vmatprep.subr.mxu0 0.0
    %816 = vmatpush1.msra.mxu0 0.0
    %817 = vmatprep.subr.mxu0 0.0
    %818 = vmatpush1.msra.mxu0 0.0
    %819 = vmatprep.subr.mxu0 0.0
    %820 = vmatpush1.msra.mxu0 0.0
    %821 = vmatprep.subr.mxu0 0.0
    %822 = vmatpush1.msra.mxu0 0.0
    %823 = vmatprep.subr.mxu0 0.0
    %824 = vmatpush1.msra.mxu0 0.0
    %825 = vmatprep.subr.mxu0 0.0
    %826 = vmatpush1.msra.mxu0 0.0
    %827 = vmatprep.subr.mxu0 0.0
    %828 = vmatpush1.msra.mxu0 0.0
    %829 = vmatprep.subr.mxu0 0.0
    %830 = vmatpush1.msra.mxu0 0.0
    %831 = vmatprep.subr.mxu0 0.0
    %832 = vmatpush1.msra.mxu0 0.0
    %833 = vmatprep.subr.mxu0 0.0
    %834 = vmatpush1.msra.mxu0 %v796
    %835 = vmatprep.subr.mxu0 0.0
    %836 = vmatpush1.msra.mxu0 %v794
    %837 = vmatprep.subr.mxu0 0.0
    %838 = vmatpush2.msra.mxu0 0.0
    %839 = vmatprep.subr.mxu0 0.0
    %840 = vmatpush2.msra.mxu0 0.0
    %841 = vmatprep.subr.mxu0 0.0
    %842 = vmatpush2.msra.mxu0 0.0
    %843 = vmatprep.subr.mxu0 0.0
    %844 = vmatpush2.msra.mxu0 0.0
    %845 = vmatprep.subr.mxu0 0.0
    %846 = vmatpush2.msra.mxu0 0.0
    %847 = vmatprep.subr.mxu0 0.0
    %848 = vmatpush2.msra.mxu0 0.0
    %849 = vmatprep.subr.mxu0 0.0
    %850 = vmatpush2.msra.mxu0 0.0
    %851 = vmatprep.subr.mxu0 0.0
    %852 = vmatpush2.msra.mxu0 0.0
    %853 = vmatprep.subr.mxu0 0.0
    %854 = vmatpush2.msra.mxu0 0.0
    %855 = vmatprep.subr.mxu0 0.0
    %856 = vmatpush2.msra.mxu0 0.0
    %857 = vmatprep.subr.mxu0 0.0
    %858 = vmatpush2.msra.mxu0 0.0
    %859 = vmatprep.subr.mxu0 0.0
    %860 = vmatpush2.msra.mxu0 0.0
    %861 = vmatprep.subr.mxu0 0.0
    %862 = vmatpush2.msra.mxu0 0.0
    %863 = vmatprep.subr.mxu0 0.0
    %864 = vmatpush2.msra.mxu0 0.0
    %865 = vmatprep.subr.mxu0 0.0
    %866 = vmatpush2.msra.mxu0 0.0
    %867 = vmatprep.subr.mxu0 0.0
    %868 = vmatpush2.msra.mxu0 0.0
    %869 = vmatprep.mubr.f32.mxu0 0.0
    %870 = vmatmul.mubr.f32.gmra.mxu0 %v800
    %v871 = vpop.f32.mrf.mxu0
    %v872 = vadd.f32 0.0, %v871
    %v873 = vpop.f32.mrf.mxu0
    %874 = vmatprep.mubr.f32.mxu0 0.0
    %875 = vmatmul.mubr.f32.gmra.mxu0 %v803
    %v876 = vpop.f32.mrf.mxu0
    %v877 = vadd.f32 0.0, %v876
    %v878 = vpop.f32.mrf.mxu0
    %879 = vdwg.mxu0
    %v880 = vadd.f32 %v668, %v872
    %v881 = vadd.f32 %v673, %v877
    %v882 = vlaneseq
    %v883 = vshrl.u32 %v882, 7
    %v884 = vsub.s32 3, %v883
    %v885 = vrot.slane %v256, %v884
    %v886 = vmul.f32 %v252, %v885
    %v887 = vmul.f32 %v253, %v885
    %v889 = vsel %vm170, %v886, 0
    %v892 = vsel %vm170, %v887, 0
    %894 = vmatprep.subr.mxu0 0.0
    %895 = vmatpush1.xpose.msra.mxu0 0.0
    %896 = vmatprep.subr.mxu0 0.0
    %897 = vmatpush1.xpose.msra.mxu0 0.0
    %898 = vmatprep.subr.mxu0 0.0
    %899 = vmatpush1.xpose.msra.mxu0 0.0
    %900 = vmatprep.subr.mxu0 0.0
    %901 = vmatpush1.xpose.msra.mxu0 0.0
    %902 = vmatprep.subr.mxu0 0.0
    %903 = vmatpush1.xpose.msra.mxu0 0.0
    %904 = vmatprep.subr.mxu0 0.0
    %905 = vmatpush1.xpose.msra.mxu0 0.0
    %906 = vmatprep.subr.mxu0 0.0
    %907 = vmatpush1.xpose.msra.mxu0 0.0
    %908 = vmatprep.subr.mxu0 0.0
    %909 = vmatpush1.xpose.msra.mxu0 0.0
    %910 = vmatprep.subr.mxu0 0.0
    %911 = vmatpush1.xpose.msra.mxu0 0.0
    %912 = vmatprep.subr.mxu0 0.0
    %913 = vmatpush1.xpose.msra.mxu0 0.0
    %914 = vmatprep.subr.mxu0 0.0
    %915 = vmatpush1.xpose.msra.mxu0 0.0
    %916 = vmatprep.subr.mxu0 0.0
    %917 = vmatpush1.xpose.msra.mxu0 0.0
    %918 = vmatprep.subr.mxu0 0.0
    %919 = vmatpush1.xpose.msra.mxu0 0.0
    %920 = vmatprep.subr.mxu0 0.0
    %921 = vmatpush1.xpose.msra.mxu0 0.0
    %922 = vmatprep.subr.mxu0 0.0
    %923 = vmatpush1.xpose.msra.mxu0 %v277
    %924 = vmatprep.subr.mxu0 0.0
    %925 = vmatpush1.xpose.msra.mxu0 %v275
    %926 = vmatprep.subr.mxu0 0.0
    %927 = vmatpush2.xpose.msra.mxu0 0.0
    %928 = vmatprep.subr.mxu0 0.0
    %929 = vmatpush2.xpose.msra.mxu0 0.0
    %930 = vmatprep.subr.mxu0 0.0
    %931 = vmatpush2.xpose.msra.mxu0 0.0
    %932 = vmatprep.subr.mxu0 0.0
    %933 = vmatpush2.xpose.msra.mxu0 0.0
    %934 = vmatprep.subr.mxu0 0.0
    %935 = vmatpush2.xpose.msra.mxu0 0.0
    %936 = vmatprep.subr.mxu0 0.0
    %937 = vmatpush2.xpose.msra.mxu0 0.0
    %938 = vmatprep.subr.mxu0 0.0
    %939 = vmatpush2.xpose.msra.mxu0 0.0
    %940 = vmatprep.subr.mxu0 0.0
    %941 = vmatpush2.xpose.msra.mxu0 0.0
    %942 = vmatprep.subr.mxu0 0.0
    %943 = vmatpush2.xpose.msra.mxu0 0.0
    %944 = vmatprep.subr.mxu0 0.0
    %945 = vmatpush2.xpose.msra.mxu0 0.0
    %946 = vmatprep.subr.mxu0 0.0
    %947 = vmatpush2.xpose.msra.mxu0 0.0
    %948 = vmatprep.subr.mxu0 0.0
    %949 = vmatpush2.xpose.msra.mxu0 0.0
    %950 = vmatprep.subr.mxu0 0.0
    %951 = vmatpush2.xpose.msra.mxu0 0.0
    %952 = vmatprep.subr.mxu0 0.0
    %953 = vmatpush2.xpose.msra.mxu0 0.0
    %954 = vmatprep.subr.mxu0 0.0
    %955 = vmatpush2.xpose.msra.mxu0 0.0
    %956 = vmatprep.subr.mxu0 0.0
    %957 = vmatpush2.xpose.msra.mxu0 0.0
    %958 = vmatprep.mubr.f32.mxu0 0.0
    %959 = vmatmul.mubr.f32.gmra.mxu0 %v889
    %v960 = vpop.f32.mrf.mxu0
    %v961 = vadd.f32 %v254, %v960
    %v962 = vpop.f32.mrf.mxu0
    %963 = vmatprep.mubr.f32.mxu0 0.0
    %964 = vmatmul.mubr.f32.gmra.mxu0 %v892
    %v965 = vpop.f32.mrf.mxu0
    %v966 = vadd.f32 %v255, %v965
    %v967 = vpop.f32.mrf.mxu0
    %968 = vdwg.mxu0
    %v969 = vsel %vm354, %v961, -inf
    %970 = vmax.xlane.f32.xlu0 %v969
    %v971 = vpop.xlane.xlu0 %970
    %v972 = vsel %vm354, %v966, -inf
    %973 = vmax.xlane.f32.xlu0 %v972
    %v974 = vpop.xlane.xlu0 %973
    %v975 = vsub.f32 %v961, %v971
    %v976 = vsub.f32 %v966, %v974
    %v977 = vmul.f32 %v975, 1.442695
    %v978 = vpow.pop %v977
    %v979 = vmul.f32 %v976, 1.442695
    %v980 = vpow.pop %v979
    %v981 = vsel %vm354, %v978, 0.0
    %982 = vadd.xlane.f32.xlu0 %v981
    %v983 = vpop.xlane.xlu0 %982
    %v984 = vsel %vm354, %v980, 0.0
    %985 = vadd.xlane.f32.xlu0 %v984
    %v986 = vpop.xlane.xlu0 %985
    %v987 = vrcp.pop %v983
    %v988 = vrcp.pop %v986
    %v989 = vmul.f32 %v978, %v987
    %v990 = vmul.f32 %v980, %v988
    %992 = vrot.lane.b32.xlu0 %v885, 64
    %v993 = vpop.permute.xlu0 %992
    %v995 = vmul.f32 %v244, %v993
    %v996 = vmul.f32 %v249, %v993
    %999 = vrot.lane.b32.xlu0 %v995, 64
    %v1000 = vpop.permute.xlu0 %999
    %1001 = vrot.lane.b32.xlu0 %v996, 64
    %v1002 = vpop.permute.xlu0 %1001
    %v1006 = vsel %vm354, %v989, 0
    %v1009 = vsel %vm354, %v990, 0
    %1011 = vmatprep.subr.mxu0 0.0
    %1012 = vmatpush1.msra.mxu0 0.0
    %1013 = vmatprep.subr.mxu0 0.0
    %1014 = vmatpush1.msra.mxu0 0.0
    %1015 = vmatprep.subr.mxu0 0.0
    %1016 = vmatpush1.msra.mxu0 0.0
    %1017 = vmatprep.subr.mxu0 0.0
    %1018 = vmatpush1.msra.mxu0 0.0
    %1019 = vmatprep.subr.mxu0 0.0
    %1020 = vmatpush1.msra.mxu0 0.0
    %1021 = vmatprep.subr.mxu0 0.0
    %1022 = vmatpush1.msra.mxu0 0.0
    %1023 = vmatprep.subr.mxu0 0.0
    %1024 = vmatpush1.msra.mxu0 0.0
    %1025 = vmatprep.subr.mxu0 0.0
    %1026 = vmatpush1.msra.mxu0 0.0
    %1027 = vmatprep.subr.mxu0 0.0
    %1028 = vmatpush1.msra.mxu0 0.0
    %1029 = vmatprep.subr.mxu0 0.0
    %1030 = vmatpush1.msra.mxu0 0.0
    %1031 = vmatprep.subr.mxu0 0.0
    %1032 = vmatpush1.msra.mxu0 0.0
    %1033 = vmatprep.subr.mxu0 0.0
    %1034 = vmatpush1.msra.mxu0 0.0
    %1035 = vmatprep.subr.mxu0 0.0
    %1036 = vmatpush1.msra.mxu0 0.0
    %1037 = vmatprep.subr.mxu0 0.0
    %1038 = vmatpush1.msra.mxu0 0.0
    %1039 = vmatprep.subr.mxu0 0.0
    %1040 = vmatpush1.msra.mxu0 %v1002
    %1041 = vmatprep.subr.mxu0 0.0
    %1042 = vmatpush1.msra.mxu0 %v1000
    %1043 = vmatprep.subr.mxu0 0.0
    %1044 = vmatpush2.msra.mxu0 0.0
    %1045 = vmatprep.subr.mxu0 0.0
    %1046 = vmatpush2.msra.mxu0 0.0
    %1047 = vmatprep.subr.mxu0 0.0
    %1048 = vmatpush2.msra.mxu0 0.0
    %1049 = vmatprep.subr.mxu0 0.0
    %1050 = vmatpush2.msra.mxu0 0.0
    %1051 = vmatprep.subr.mxu0 0.0
    %1052 = vmatpush2.msra.mxu0 0.0
    %1053 = vmatprep.subr.mxu0 0.0
    %1054 = vmatpush2.msra.mxu0 0.0
    %1055 = vmatprep.subr.mxu0 0.0
    %1056 = vmatpush2.msra.mxu0 0.0
    %1057 = vmatprep.subr.mxu0 0.0
    %1058 = vmatpush2.msra.mxu0 0.0
    %1059 = vmatprep.subr.mxu0 0.0
    %1060 = vmatpush2.msra.mxu0 0.0
    %1061 = vmatprep.subr.mxu0 0.0
    %1062 = vmatpush2.msra.mxu0 0.0
    %1063 = vmatprep.subr.mxu0 0.0
    %1064 = vmatpush2.msra.mxu0 0.0
    %1065 = vmatprep.subr.mxu0 0.0
    %1066 = vmatpush2.msra.mxu0 0.0
    %1067 = vmatprep.subr.mxu0 0.0
    %1068 = vmatpush2.msra.mxu0 0.0
    %1069 = vmatprep.subr.mxu0 0.0
    %1070 = vmatpush2.msra.mxu0 0.0
    %1071 = vmatprep.subr.mxu0 0.0
    %1072 = vmatpush2.msra.mxu0 0.0
    %1073 = vmatprep.subr.mxu0 0.0
    %1074 = vmatpush2.msra.mxu0 0.0
    %1075 = vmatprep.mubr.f32.mxu0 0.0
    %1076 = vmatmul.mubr.f32.gmra.mxu0 %v1006
    %v1077 = vpop.f32.mrf.mxu0
    %v1078 = vadd.f32 0.0, %v1077
    %v1079 = vpop.f32.mrf.mxu0
    %1080 = vmatprep.mubr.f32.mxu0 0.0
    %1081 = vmatmul.mubr.f32.gmra.mxu0 %v1009
    %v1082 = vpop.f32.mrf.mxu0
    %v1083 = vadd.f32 0.0, %v1082
    %v1084 = vpop.f32.mrf.mxu0
    %1085 = vdwg.mxu0
    %v1086 = vadd.f32 %v880, %v1078
    %v1087 = vadd.f32 %v881, %v1083
    %v1088 = vld [vmem:[%s5] sm:$0xff]
    %v1089 = vld [vmem:[%s5 + $0x8] sm:$0xff]
    %v1090 = vld [vmem:[%s5 + $0x10] sm:$0xff]
    %v1091 = vld [vmem:[%s5 + $0x18] sm:$0xff]
    %v1092 = vld [vmem:[#allocation7] sm:$0x1]
    %v1094 = vlaneseq
    %v1095 = vshrl.u32 %v1094, 7
    %v1096 = vsub.s32 0, %v1095
    %v1097 = vrot.slane %v1092, %v1096
    %v1100 = vsel %vm170, %v1086, 0
    %v1103 = vsel %vm170, %v1087, 0
    %1105 = vmatprep.subr.mxu0 0.0
    %1106 = vmatpush1.msra.mxu0 0.0
    %1107 = vmatprep.subr.mxu0 0.0
    %1108 = vmatpush1.msra.mxu0 0.0
    %1109 = vmatprep.subr.mxu0 0.0
    %1110 = vmatpush1.msra.mxu0 0.0
    %1111 = vmatprep.subr.mxu0 0.0
    %1112 = vmatpush1.msra.mxu0 0.0
    %1113 = vmatprep.subr.mxu0 0.0
    %1114 = vmatpush1.msra.mxu0 0.0
    %1115 = vmatprep.subr.mxu0 0.0
    %1116 = vmatpush1.msra.mxu0 0.0
    %1117 = vmatprep.subr.mxu0 0.0
    %1118 = vmatpush1.msra.mxu0 0.0
    %1119 = vmatprep.subr.mxu0 0.0
    %1120 = vmatpush1.msra.mxu0 0.0
    %1121 = vmatprep.subr.mxu0 0.0
    %1122 = vmatpush1.msra.mxu0 0.0
    %1123 = vmatprep.subr.mxu0 0.0
    %1124 = vmatpush1.msra.mxu0 0.0
    %1125 = vmatprep.subr.mxu0 0.0
    %1126 = vmatpush1.msra.mxu0 0.0
    %1127 = vmatprep.subr.mxu0 0.0
    %1128 = vmatpush1.msra.mxu0 0.0
    %1129 = vmatprep.subr.mxu0 0.0
    %1130 = vmatpush1.msra.mxu0 %v1091
    %1131 = vmatprep.subr.mxu0 0.0
    %1132 = vmatpush1.msra.mxu0 %v1090
    %1133 = vmatprep.subr.mxu0 0.0
    %1134 = vmatpush1.msra.mxu0 %v1089
    %1135 = vmatprep.subr.mxu0 0.0
    %1136 = vmatpush1.msra.mxu0 %v1088
    %1137 = vmatprep.subr.mxu0 0.0
    %1138 = vmatpush2.msra.mxu0 0.0
    %1139 = vmatprep.subr.mxu0 0.0
    %1140 = vmatpush2.msra.mxu0 0.0
    %1141 = vmatprep.subr.mxu0 0.0
    %1142 = vmatpush2.msra.mxu0 0.0
    %1143 = vmatprep.subr.mxu0 0.0
    %1144 = vmatpush2.msra.mxu0 0.0
    %1145 = vmatprep.subr.mxu0 0.0
    %1146 = vmatpush2.msra.mxu0 0.0
    %1147 = vmatprep.subr.mxu0 0.0
    %1148 = vmatpush2.msra.mxu0 0.0
    %1149 = vmatprep.subr.mxu0 0.0
    %1150 = vmatpush2.msra.mxu0 0.0
    %1151 = vmatprep.subr.mxu0 0.0
    %1152 = vmatpush2.msra.mxu0 0.0
    %1153 = vmatprep.subr.mxu0 0.0
    %1154 = vmatpush2.msra.mxu0 0.0
    %1155 = vmatprep.subr.mxu0 0.0
    %1156 = vmatpush2.msra.mxu0 0.0
    %1157 = vmatprep.subr.mxu0 0.0
    %1158 = vmatpush2.msra.mxu0 0.0
    %1159 = vmatprep.subr.mxu0 0.0
    %1160 = vmatpush2.msra.mxu0 0.0
    %1161 = vmatprep.subr.mxu0 0.0
    %1162 = vmatpush2.msra.mxu0 0.0
    %1163 = vmatprep.subr.mxu0 0.0
    %1164 = vmatpush2.msra.mxu0 0.0
    %1165 = vmatprep.subr.mxu0 0.0
    %1166 = vmatpush2.msra.mxu0 0.0
    %1167 = vmatprep.subr.mxu0 0.0
    %1168 = vmatpush2.msra.mxu0 0.0
    %1169 = vmatprep.mubr.f32.mxu0 0.0
    %1170 = vmatmul.mubr.f32.gmra.mxu0 %v1100
    %v1171 = vpop.f32.mrf.mxu0
    %v1172 = vadd.f32 %v1097, %v1171
    %v1173 = vpop.f32.mrf.mxu0
    %1174 = vmatprep.mubr.f32.mxu0 0.0
    %1175 = vmatmul.mubr.f32.gmra.mxu0 %v1103
    %v1176 = vpop.f32.mrf.mxu0
    %v1177 = vadd.f32 %v1097, %v1176
    %v1178 = vpop.f32.mrf.mxu0
    %1179 = vdwg.mxu0
    %v1180 = vadd.f32 %v157, %v1172
    %v1181 = vadd.f32 %v158, %v1177
    %v1182 = vld [vmem:[#allocation11] sm:$0x1]
    %v1183 = vld [vmem:[#allocation13] sm:$0x1]
    %v1184 = vsel %vm170, %v1180, 0.0
    %1185 = vadd.xlane.f32.xlu0 %v1184
    %v1186 = vpop.xlane.xlu0 %1185
    %v1187 = vsel %vm170, %v1181, 0.0
    %1188 = vadd.xlane.f32.xlu0 %v1187
    %v1189 = vpop.xlane.xlu0 %1188
    %v1190 = vrcp.pop 32.0
    %v1191 = vmul.f32 %v1186, %v1190
    %v1192 = vmul.f32 %v1189, %v1190
    %v1193 = vsub.f32 %v1180, %v1191
    %v1194 = vsub.f32 %v1181, %v1192
    %v1195 = vmul.f32 %v1193, %v1193
    %v1196 = vmul.f32 %v1194, %v1194
    %v1197 = vsel %vm170, %v1195, 0.0
    %1198 = vadd.xlane.f32.xlu0 %v1197
    %v1199 = vpop.xlane.xlu0 %1198
    %v1200 = vsel %vm170, %v1196, 0.0
    %1201 = vadd.xlane.f32.xlu0 %v1200
    %v1202 = vpop.xlane.xlu0 %1201
    %v1203 = vmul.f32 %v1199, %v1190
    %v1204 = vmul.f32 %v1202, %v1190
    %v1205 = vadd.f32 %v1203, 1e-05
    %v1206 = vadd.f32 %v1204, 1e-05
    %v1207 = vrsqrt.pop %v1205
    %v1208 = vrsqrt.pop %v1206
    %v1209 = vmul.f32 %v1193, %v1207
    %v1210 = vmul.f32 %v1194, %v1208
    %v1212 = vlaneseq
    %v1213 = vshrl.u32 %v1212, 7
    %v1214 = vsub.s32 0, %v1213
    %v1215 = vrot.slane %v1182, %v1214
    %v1217 = vmul.f32 %v1209, %v1215
    %v1218 = vmul.f32 %v1210, %v1215
    %v1220 = vlaneseq
    %v1221 = vshrl.u32 %v1220, 7
    %v1222 = vsub.s32 0, %v1221
    %v1223 = vrot.slane %v1183, %v1222
    %v1225 = vadd.f32 %v1217, %v1223
    %v1226 = vadd.f32 %v1218, %v1223
    %v1227 = vld [vmem:[%s7] sm:$0xff]
    %v1228 = vld [vmem:[%s7 + $0x8] sm:$0xff]
    %v1229 = vld [vmem:[%s7 + $0x10] sm:$0xff]
    %v1230 = vld [vmem:[%s7 + $0x18] sm:$0xff]
    %v1231 = vld [vmem:[#allocation8] sm:$0x1]
    %v1233 = vlaneseq
    %v1234 = vshrl.u32 %v1233, 7
    %v1235 = vsub.s32 0, %v1234
    %v1236 = vrot.slane %v1231, %v1235
    %v1239 = vsel %vm170, %v1225, 0
    %v1242 = vsel %vm170, %v1226, 0
    %1244 = vmatprep.subr.mxu0 0.0
    %1245 = vmatpush1.msra.mxu0 0.0
    %1246 = vmatprep.subr.mxu0 0.0
    %1247 = vmatpush1.msra.mxu0 0.0
    %1248 = vmatprep.subr.mxu0 0.0
    %1249 = vmatpush1.msra.mxu0 0.0
    %1250 = vmatprep.subr.mxu0 0.0
    %1251 = vmatpush1.msra.mxu0 0.0
    %1252 = vmatprep.subr.mxu0 0.0
    %1253 = vmatpush1.msra.mxu0 0.0
    %1254 = vmatprep.subr.mxu0 0.0
    %1255 = vmatpush1.msra.mxu0 0.0
    %1256 = vmatprep.subr.mxu0 0.0
    %1257 = vmatpush1.msra.mxu0 0.0
    %1258 = vmatprep.subr.mxu0 0.0
    %1259 = vmatpush1.msra.mxu0 0.0
    %1260 = vmatprep.subr.mxu0 0.0
    %1261 = vmatpush1.msra.mxu0 0.0
    %1262 = vmatprep.subr.mxu0 0.0
    %1263 = vmatpush1.msra.mxu0 0.0
    %1264 = vmatprep.subr.mxu0 0.0
    %1265 = vmatpush1.msra.mxu0 0.0
    %1266 = vmatprep.subr.mxu0 0.0
    %1267 = vmatpush1.msra.mxu0 0.0
    %1268 = vmatprep.subr.mxu0 0.0
    %1269 = vmatpush1.msra.mxu0 %v1230
    %1270 = vmatprep.subr.mxu0 0.0
    %1271 = vmatpush1.msra.mxu0 %v1229
    %1272 = vmatprep.subr.mxu0 0.0
    %1273 = vmatpush1.msra.mxu0 %v1228
    %1274 = vmatprep.subr.mxu0 0.0
    %1275 = vmatpush1.msra.mxu0 %v1227
    %1276 = vmatprep.subr.mxu0 0.0
    %1277 = vmatpush2.msra.mxu0 0.0
    %1278 = vmatprep.subr.mxu0 0.0
    %1279 = vmatpush2.msra.mxu0 0.0
    %1280 = vmatprep.subr.mxu0 0.0
    %1281 = vmatpush2.msra.mxu0 0.0
    %1282 = vmatprep.subr.mxu0 0.0
    %1283 = vmatpush2.msra.mxu0 0.0
    %1284 = vmatprep.subr.mxu0 0.0
    %1285 = vmatpush2.msra.mxu0 0.0
    %1286 = vmatprep.subr.mxu0 0.0
    %1287 = vmatpush2.msra.mxu0 0.0
    %1288 = vmatprep.subr.mxu0 0.0
    %1289 = vmatpush2.msra.mxu0 0.0
    %1290 = vmatprep.subr.mxu0 0.0
    %1291 = vmatpush2.msra.mxu0 0.0
    %1292 = vmatprep.subr.mxu0 0.0
    %1293 = vmatpush2.msra.mxu0 0.0
    %1294 = vmatprep.subr.mxu0 0.0
    %1295 = vmatpush2.msra.mxu0 0.0
    %1296 = vmatprep.subr.mxu0 0.0
    %1297 = vmatpush2.msra.mxu0 0.0
    %1298 = vmatprep.subr.mxu0 0.0
    %1299 = vmatpush2.msra.mxu0 0.0
    %1300 = vmatprep.subr.mxu0 0.0
    %1301 = vmatpush2.msra.mxu0 0.0
    %1302 = vmatprep.subr.mxu0 0.0
    %1303 = vmatpush2.msra.mxu0 0.0
    %1304 = vmatprep.subr.mxu0 0.0
    %1305 = vmatpush2.msra.mxu0 0.0
    %1306 = vmatprep.subr.mxu0 0.0
    %1307 = vmatpush2.msra.mxu0 0.0
    %1308 = vmatprep.mubr.f32.mxu0 0.0
    %1309 = vmatmul.mubr.f32.gmra.mxu0 %v1239
    %v1310 = vpop.f32.mrf.mxu0
    %v1311 = vadd.f32 %v1236, %v1310
    %v1312 = vpop.f32.mrf.mxu0
    %1313 = vmatprep.mubr.f32.mxu0 0.0
    %1314 = vmatmul.mubr.f32.gmra.mxu0 %v1242
    %v1315 = vpop.f32.mrf.mxu0
    %v1316 = vadd.f32 %v1236, %v1315
    %v1317 = vpop.f32.mrf.mxu0
    %1318 = vdwg.mxu0
    %v1319 = vmax.f32 %v1311, 0.0
    %v1320 = vmax.f32 %v1316, 0.0
    %v1321 = vld [vmem:[%s9] sm:$0xff]
    %v1322 = vld [vmem:[%s9 + $0x8] sm:$0xff]
    %v1323 = vld [vmem:[%s9 + $0x10] sm:$0xff]
    %v1324 = vld [vmem:[%s9 + $0x18] sm:$0xff]
    %v1325 = vld [vmem:[%s9 + $0x20] sm:$0xff]
    %v1326 = vld [vmem:[%s9 + $0x28] sm:$0xff]
    %v1327 = vld [vmem:[%s9 + $0x30] sm:$0xff]
    %v1328 = vld [vmem:[%s9 + $0x38] sm:$0xff]
    %v1329 = vld [vmem:[#allocation10] sm:$0x1]
    %v1331 = vlaneseq
    %v1332 = vshrl.u32 %v1331, 7
    %v1333 = vsub.s32 0, %v1332
    %v1334 = vrot.slane %v1329, %v1333
    %vm1336 = vcmask 523264
    %v1338 = vsel %vm1336, %v1319, 0
    %v1341 = vsel %vm1336, %v1320, 0
    %1343 = vmatprep.subr.mxu0 0.0
    %1344 = vmatpush1.msra.mxu0 0.0
    %1345 = vmatprep.subr.mxu0 0.0
    %1346 = vmatpush1.msra.mxu0 0.0
    %1347 = vmatprep.subr.mxu0 0.0
    %1348 = vmatpush1.msra.mxu0 0.0
    %1349 = vmatprep.subr.mxu0 0.0
    %1350 = vmatpush1.msra.mxu0 0.0
    %1351 = vmatprep.subr.mxu0 0.0
    %1352 = vmatpush1.msra.mxu0 0.0
    %1353 = vmatprep.subr.mxu0 0.0
    %1354 = vmatpush1.msra.mxu0 0.0
    %1355 = vmatprep.subr.mxu0 0.0
    %1356 = vmatpush1.msra.mxu0 0.0
    %1357 = vmatprep.subr.mxu0 0.0
    %1358 = vmatpush1.msra.mxu0 0.0
    %1359 = vmatprep.subr.mxu0 0.0
    %1360 = vmatpush1.msra.mxu0 %v1328
    %1361 = vmatprep.subr.mxu0 0.0
    %1362 = vmatpush1.msra.mxu0 %v1327
    %1363 = vmatprep.subr.mxu0 0.0
    %1364 = vmatpush1.msra.mxu0 %v1326
    %1365 = vmatprep.subr.mxu0 0.0
    %1366 = vmatpush1.msra.mxu0 %v1325
    %1367 = vmatprep.subr.mxu0 0.0
    %1368 = vmatpush1.msra.mxu0 %v1324
    %1369 = vmatprep.subr.mxu0 0.0
    %1370 = vmatpush1.msra.mxu0 %v1323
    %1371 = vmatprep.subr.mxu0 0.0
    %1372 = vmatpush1.msra.mxu0 %v1322
    %1373 = vmatprep.subr.mxu0 0.0
    %1374 = vmatpush1.msra.mxu0 %v1321
    %1375 = vmatprep.subr.mxu0 0.0
    %1376 = vmatpush2.msra.mxu0 0.0
    %1377 = vmatprep.subr.mxu0 0.0
    %1378 = vmatpush2.msra.mxu0 0.0
    %1379 = vmatprep.subr.mxu0 0.0
    %1380 = vmatpush2.msra.mxu0 0.0
    %1381 = vmatprep.subr.mxu0 0.0
    %1382 = vmatpush2.msra.mxu0 0.0
    %1383 = vmatprep.subr.mxu0 0.0
    %1384 = vmatpush2.msra.mxu0 0.0
    %1385 = vmatprep.subr.mxu0 0.0
    %1386 = vmatpush2.msra.mxu0 0.0
    %1387 = vmatprep.subr.mxu0 0.0
    %1388 = vmatpush2.msra.mxu0 0.0
    %1389 = vmatprep.subr.mxu0 0.0
    %1390 = vmatpush2.msra.mxu0 0.0
    %1391 = vmatprep.subr.mxu0 0.0
    %1392 = vmatpush2.msra.mxu0 0.0
    %1393 = vmatprep.subr.mxu0 0.0
    %1394 = vmatpush2.msra.mxu0 0.0
    %1395 = vmatprep.subr.mxu0 0.0
    %1396 = vmatpush2.msra.mxu0 0.0
    %1397 = vmatprep.subr.mxu0 0.0
    %1398 = vmatpush2.msra.mxu0 0.0
    %1399 = vmatprep.subr.mxu0 0.0
    %1400 = vmatpush2.msra.mxu0 0.0
    %1401 = vmatprep.subr.mxu0 0.0
    %1402 = vmatpush2.msra.mxu0 0.0
    %1403 = vmatprep.subr.mxu0 0.0
    %1404 = vmatpush2.msra.mxu0 0.0
    %1405 = vmatprep.subr.mxu0 0.0
    %1406 = vmatpush2.msra.mxu0 0.0
    %1407 = vmatprep.mubr.f32.mxu0 0.0
    %1408 = vmatmul.mubr.f32.gmra.mxu0 %v1338
    %v1409 = vpop.f32.mrf.mxu0
    %v1410 = vadd.f32 %v1334, %v1409
    %v1411 = vpop.f32.mrf.mxu0
    %1412 = vmatprep.mubr.f32.mxu0 0.0
    %1413 = vmatmul.mubr.f32.gmra.mxu0 %v1341
    %v1414 = vpop.f32.mrf.mxu0
    %v1415 = vadd.f32 %v1334, %v1414
    %v1416 = vpop.f32.mrf.mxu0
    %1417 = vdwg.mxu0
    %v1418 = vadd.f32 %v1225, %v1410
    %v1419 = vadd.f32 %v1226, %v1415
    %v1420 = vld [vmem:[#allocation14] sm:$0x1]
    %v1421 = vld [vmem:[#allocation16] sm:$0x1]
    %v1422 = vsel %vm170, %v1418, 0.0
    %1423 = vadd.xlane.f32.xlu0 %v1422
    %v1424 = vpop.xlane.xlu0 %1423
    %v1425 = vsel %vm170, %v1419, 0.0
    %1426 = vadd.xlane.f32.xlu0 %v1425
    %v1427 = vpop.xlane.xlu0 %1426
    %v1428 = vmul.f32 %v1424, %v1190
    %v1429 = vmul.f32 %v1427, %v1190
    %v1430 = vsub.f32 %v1418, %v1428
    %v1431 = vsub.f32 %v1419, %v1429
    %v1432 = vmul.f32 %v1430, %v1430
    %v1433 = vmul.f32 %v1431, %v1431
    %v1434 = vsel %vm170, %v1432, 0.0
    %1435 = vadd.xlane.f32.xlu0 %v1434
    %v1436 = vpop.xlane.xlu0 %1435
    %v1437 = vsel %vm170, %v1433, 0.0
    %1438 = vadd.xlane.f32.xlu0 %v1437
    %v1439 = vpop.xlane.xlu0 %1438
    %v1440 = vmul.f32 %v1436, %v1190
    %v1441 = vmul.f32 %v1439, %v1190
    %v1442 = vadd.f32 %v1440, 1e-05
    %v1443 = vadd.f32 %v1441, 1e-05
    %v1444 = vrsqrt.pop %v1442
    %v1445 = vrsqrt.pop %v1443
    %v1446 = vmul.f32 %v1430, %v1444
    %v1447 = vmul.f32 %v1431, %v1445
    %v1449 = vlaneseq
    %v1450 = vshrl.u32 %v1449, 7
    %v1451 = vsub.s32 0, %v1450
    %v1452 = vrot.slane %v1420, %v1451
    %v1454 = vmul.f32 %v1446, %v1452
    %v1455 = vmul.f32 %v1447, %v1452
    %v1457 = vlaneseq
    %v1458 = vshrl.u32 %v1457, 7
    %v1459 = vsub.s32 0, %v1458
    %v1460 = vrot.slane %v1421, %v1459
    %v1462 = vadd.f32 %v1454, %v1460
    %v1463 = vadd.f32 %v1455, %v1460
    %1464 = vst.msk [vmem:[#allocation17] sm:$0xff] %vm170, %v1462
    %1465 = vst.msk [vmem:[#allocation17 + $0x8] sm:$0xff] %vm170, %v1463
    // Predicated region
    $region98: #{transformer_encoder_layer.1} parent=1 // pred_check
      _
    $region99: #{transformer_encoder_layer.1} parent=1 // pred_check_branch
      %1467 = sbr.rel (0) target = $region101
    $region100: #{transformer_encoder_layer.1} parent=1 // pred_region
      %s1469 = ssub.s32 256, 256
      %1470 = vsyncadd [#allocation4], %s1469
      %s1471 = sshll.u32 [#allocation17], 4
      %s1472 = int_to_ptr.vmem [resolvable:$true] %s1471
      %1477 = dma.vmem_to_hbm [thread:$0]  %s1472, 256, %s15, [#allocation4], 128, 128, 8
    $region101: #{transformer_encoder_layer.1} parent=1 // pred_fallthru
      _
    // Predicated region
    $region102: #{transformer_encoder_layer.1} parent=1 // pred_check
      _
    $region103: #{transformer_encoder_layer.1} parent=1 // pred_check_branch
      %1479 = sbr.rel (0) target = $region105
    $region104: #{transformer_encoder_layer.1} parent=1 // pred_region
      %1480 = dma.done [#allocation4], 256
    $region105: #{transformer_encoder_layer.1} parent=1 // pred_fallthru
      _
    %1481 = vsyncpa [#allocation3], 1
    %1482 = vsyncpa [#allocation6], 1
    %1483 = vsyncpa [#allocation9], 1
    %1484 = vsyncpa [#allocation12], 1
    %1485 = vsyncpa [#allocation15], 1
    %1486 = vsyncpa [#allocation4], 1

</llo_original>
